<compile_context>
chip_gen: v7x
topology: tpu7x:2x2x1
jax: 0.10.0
libtpu: 0.0.40
codegen_flags: <defaults>
</compile_context>

<pallas_src>
import numpy as np
import jax
import jax.numpy as jnp
from jax import lax
from jax.experimental import pallas as pl
from jax.experimental.pallas import tpu as pltpu


# ----------------------------------------------------------------------------- #
# small math helpers (usable both inside the kernel and in the pure-JAX reference)
# ----------------------------------------------------------------------------- #
def _round_up(x, m):
    return ((x + m - 1) // m) * m


def _ln(z, g, b, eps=1e-5):
    mu = jnp.mean(z, axis=-1, keepdims=True)
    var = jnp.mean((z - mu) ** 2, axis=-1, keepdims=True)
    return (z - mu) * lax.rsqrt(var + eps) * g + b


def _elu(x):
    return jnp.where(x > 0, x, jnp.exp(jnp.minimum(x, 0.0)) - 1.0)


def _gelu_tanh(x):
    c = 0.7978845608028654  # sqrt(2/pi)
    return 0.5 * x * (1.0 + jnp.tanh(c * (x + 0.044715 * x * x * x)))


# ----------------------------------------------------------------------------- #
# fused kernel
# ----------------------------------------------------------------------------- #
def make_survpath_kernel(*, P, P_pad, Nw, Nw_pad, D, dh, hdim, C):
    N_pad = P_pad + Nw_pad
    f32 = jnp.float32
    bf16 = jnp.bfloat16

    def kernel(x_ref, wsi_ref, w1_ref, b1_ref, w2_ref, b2_ref, wsiw_ref,
               vd_ref, wqkv_ref, ffw_ref, vh_ref, bias_ref, lw1_ref, lw2_ref,
               o_ref):
        # --- six SNN blocks, layer 1 as ONE stacked matmul ----------------------
        # x_ref: [P_pad, K_pad]; row p is nonzero only in its own K-segment, so
        # x @ w1_stack puts pathway p's hidden vector in row p.
        h1 = jnp.dot(x_ref[...].astype(bf16), w1_ref[...],
                     preferred_element_type=f32)                # [P_pad, D]
        h1 = _elu(h1 + b1_ref[...])                             # pad rows stay 0

        # rebuild block layout [P_pad, P*D] (row p's data only in segment p)
        row = lax.broadcasted_iota(jnp.int32, (P_pad, P * D), 0)
        col = lax.broadcasted_iota(jnp.int32, (P_pad, P * D), 1)
        lo = row * D
        in_block = jnp.logical_and(col >= lo, col < lo + D)
        h1_blocks = jnp.where(in_block,
                              jnp.concatenate([h1] * P, axis=1), 0.0)
        h2 = jnp.dot(h1_blocks.astype(bf16), w2_ref[...],
                     preferred_element_type=f32)                # [P_pad, D]
        h_omic = _elu(h2 + b2_ref[...])                         # pad rows stay 0

        # --- WSI projection ------------------------------------------------------
        wsi_emb = (jnp.dot(wsi_ref[...].astype(bf16), wsiw_ref[...],
                           preferred_element_type=f32) + vd_ref[0:1, :])  # [Nw_pad, D]

        # MCCSDG is identity in eval mode; token sequence built in registers.
        tokens = jnp.concatenate([h_omic, wsi_emb], axis=0)     # [N_pad, D]

        # --- MMAttentionLayer: LN -> fused qkv -> masked cross attention --------
        xn = _ln(tokens, vd_ref[1:2, :], vd_ref[2:3, :])
        qkv = jnp.dot(xn.astype(bf16), wqkv_ref[...],
                      preferred_element_type=f32)               # [N_pad, 3*dh]
        q = qkv[:, 0:dh].astype(bf16)                           # scale folded in wq
        k = qkv[:, dh:2 * dh].astype(bf16)
        v = qkv[:, 2 * dh:3 * dh].astype(bf16)
        s = lax.dot_general(q, k, (((1,), (1,)), ((), ())),
                            preferred_element_type=f32)         # [N_pad, N_pad]
        s = s + bias_ref[...]                                   # precomputed 0/-1e30
        m = jnp.max(s, axis=-1, keepdims=True)
        e = jnp.exp(s - m)
        a = e * pl.reciprocal(jnp.sum(e, axis=-1, keepdims=True), approx=True)
        mm = jnp.dot(a.astype(bf16), v, preferred_element_type=f32)   # [N_pad, dh]

        # --- FeedForward (LN -> Linear -> GELU -> Linear) + final LayerNorm -----
        h = _ln(mm, vh_ref[0:1, :], vh_ref[1:2, :])
        h = jnp.dot(h.astype(bf16), ffw_ref[0],
                    preferred_element_type=f32) + vh_ref[2:3, :]
        h = _gelu_tanh(h)
        h = jnp.dot(h.astype(bf16), ffw_ref[1],
                    preferred_element_type=f32) + vh_ref[3:4, :]
        y = _ln(h, vh_ref[4:5, :], vh_ref[5:6, :])              # [N_pad, dh]

        # --- masked mean pooling over pathway / histology tokens ----------------
        ridx = lax.broadcasted_iota(jnp.int32, (N_pad, dh), 0)
        pmask = (ridx < P).astype(f32)
        wmask = jnp.logical_and(ridx >= P_pad, ridx < P_pad + Nw).astype(f32)
        paths_mean = jnp.sum(y * pmask, axis=0, keepdims=True) * (1.0 / P)
        wsi_mean = jnp.sum(y * wmask, axis=0, keepdims=True) * (1.0 / Nw)

        # --- to_logits: one fused Linear(2*dh -> hdim) + ReLU + Linear(hdim -> C)
        emb = jnp.concatenate([paths_mean, wsi_mean], axis=1)   # [1, 2*dh]
        z = jnp.maximum(
            jnp.dot(emb, lw1_ref[0:2 * dh, :], preferred_element_type=f32)
            + lw1_ref[2 * dh:2 * dh + 1, :], 0.0)
        o_ref[...] = (jnp.dot(z, lw2_ref[0:hdim, :], preferred_element_type=f32)
                      + lw2_ref[hdim:hdim + 1, :])

    return kernel


# ----------------------------------------------------------------------------- #
# synthetic parameters (deterministic)
# ----------------------------------------------------------------------------- #
def init_params(key, omic_sizes, D, dh, E, hdim, num_classes):
    keys = iter(jax.random.split(key, 8 * len(omic_sizes) + 64))

    def w(shape, scale=0.05):
        return scale * jax.random.normal(next(keys), shape, jnp.float32)

    params = {}
    params["snn"] = [dict(w1=w((s, D)), b1=w((1, D)), w2=w((D, D)), b2=w((1, D)))
                     for s in omic_sizes]
    params["wsi_proj"] = dict(w=w((E, D)), b=w((1, D)))
    params["attn"] = dict(
        ln_g=jnp.ones((1, D), jnp.float32), ln_b=jnp.zeros((1, D), jnp.float32),
        wq=w((D, dh)), wk=w((D, dh)), wv=w((D, dh)))
    params["ff"] = dict(
        g=jnp.ones((1, dh), jnp.float32), b=jnp.zeros((1, dh), jnp.float32),
        w1=w((dh, dh)), b1=w((1, dh)), w2=w((dh, dh)), b2=w((1, dh)))
    params["post_ln"] = dict(
        g=jnp.ones((1, dh), jnp.float32), b=jnp.zeros((1, dh), jnp.float32))
    params["logits"] = dict(
        w1p=w((dh, hdim)), w1w=w((dh, hdim)), b1=w((1, hdim)),
        w2=w((hdim, num_classes)), b2=w((1, num_classes)))
    return params


# ----------------------------------------------------------------------------- #
# packing (done once): stacked SNN weights (bf16) + grouped small params
# ----------------------------------------------------------------------------- #
def pack_params(params, omic_sizes, *, P_pad, K_pad, D, dh):
    bf16 = jnp.bfloat16
    P = len(omic_sizes)
    scale = float(dh) ** -0.5

    w1_stack = jnp.zeros((K_pad, D), jnp.float32)
    b1_stack = jnp.zeros((P_pad, D), jnp.float32)
    b2_stack = jnp.zeros((P_pad, D), jnp.float32)
    off = 0
    for p, s in enumerate(omic_sizes):
        w1_stack = w1_stack.at[off:off + s, :].set(params["snn"][p]["w1"])
        b1_stack = b1_stack.at[p:p + 1, :].set(params["snn"][p]["b1"])
        b2_stack = b2_stack.at[p:p + 1, :].set(params["snn"][p]["b2"])
        off += s
    w2_vert = jnp.concatenate([params["snn"][p]["w2"] for p in range(P)], axis=0)

    wsi_w = params["wsi_proj"]["w"]
    vecs_d = jnp.concatenate([params["wsi_proj"]["b"],
                              params["attn"]["ln_g"],
                              params["attn"]["ln_b"]], axis=0)          # [3, D] f32
    wqkv = jnp.concatenate([params["attn"]["wq"] * scale,               # scale folded
                            params["attn"]["wk"],
                            params["attn"]["wv"]], axis=1)              # [D, 3*dh]
    ff_w = jnp.stack([params["ff"]["w1"], params["ff"]["w2"]], axis=0)  # [2, dh, dh]
    vecs_h = jnp.concatenate([params["ff"]["g"], params["ff"]["b"],
                              params["ff"]["b1"], params["ff"]["b2"],
                              params["post_ln"]["g"],
                              params["post_ln"]["b"]], axis=0)          # [6, dh] f32
    lw1b = jnp.concatenate([params["logits"]["w1p"], params["logits"]["w1w"],
                            params["logits"]["b1"]], axis=0)            # [2*dh+1, hdim]
    lw2b = jnp.concatenate([params["logits"]["w2"], params["logits"]["b2"]], axis=0)

    return dict(w1_stack=w1_stack.astype(bf16), b1_stack=b1_stack,
                w2_vert=w2_vert.astype(bf16), b2_stack=b2_stack,
                wsi_w=wsi_w.astype(bf16), vecs_d=vecs_d,
                wqkv=wqkv.astype(bf16), ff_w=ff_w.astype(bf16),
                vecs_h=vecs_h, lw1b=lw1b, lw2b=lw2b)


def pack_omics(x_omic, omic_sizes, *, P_pad, K_pad):
    # place omic vector p in its own column segment of a [P_pad, K_pad] matrix
    rows = []
    off = 0
    for x, s in zip(x_omic, omic_sizes):
        rows.append(jnp.pad(x.reshape(1, s), ((0, 0), (off, K_pad - off - s))))
        off += s
    if P_pad > len(x_omic):
        rows.append(jnp.zeros((P_pad - len(x_omic), K_pad), jnp.float32))
    return jnp.concatenate(rows, axis=0)


def build_attn_bias(P, P_pad, Nw, Nw_pad):
    # additive attention bias (0 = allowed, -1e30 = masked), built once in numpy:
    # pathway queries attend to all real tokens; histology queries attend only to
    # pathway tokens; padded key columns are masked for everyone.
    N_pad = P_pad + Nw_pad
    row = np.arange(N_pad)[:, None]
    col = np.arange(N_pad)[None, :]
    key_is_path = col < P
    key_is_wsi = (col >= P_pad) & (col < P_pad + Nw)
    allow = key_is_path | ((row < P) & key_is_wsi)
    return jnp.asarray(np.where(allow, 0.0, -1e30).astype(np.float32))


# ----------------------------------------------------------------------------- #
# forward wrapper: one fused pallas_call, only logits go back to HBM
# ----------------------------------------------------------------------------- #
def build_survpath_forward(omic_sizes, *, D, dh, E, hdim, C, Nw):
    P = len(omic_sizes)
    P_pad = _round_up(P, 8)
    Nw_pad = _round_up(Nw, 8)
    K_pad = _round_up(int(sum(omic_sizes)), 128)
    attn_bias = build_attn_bias(P, P_pad, Nw, Nw_pad)
    kernel = make_survpath_kernel(P=P, P_pad=P_pad, Nw=Nw, Nw_pad=Nw_pad,
                                  D=D, dh=dh, hdim=hdim, C=C)

    def forward(packed, x_omic, wsi):
        x_pad = pack_omics(x_omic, omic_sizes,
                           P_pad=P_pad, K_pad=K_pad).astype(jnp.float32)
        wsi2d = wsi.reshape(-1, E).astype(jnp.float32)
        if Nw_pad > Nw:
            wsi2d = jnp.pad(wsi2d, ((0, Nw_pad - Nw), (0, 0)))
        inputs = (x_pad, wsi2d, packed["w1_stack"], packed["b1_stack"],
                  packed["w2_vert"], packed["b2_stack"], packed["wsi_w"],
                  packed["vecs_d"], packed["wqkv"], packed["ff_w"],
                  packed["vecs_h"], attn_bias, packed["lw1b"], packed["lw2b"])
        return pl.pallas_call(
            kernel,
            out_shape=jax.ShapeDtypeStruct((1, C), jnp.float32),
            in_specs=[pl.BlockSpec(memory_space=pltpu.MemorySpace.VMEM)] * len(inputs),
            out_specs=pl.BlockSpec(memory_space=pltpu.MemorySpace.VMEM),
        )(*inputs)

    return jax.jit(forward)


# ----------------------------------------------------------------------------- #
# pure-JAX reference of the same (eval-mode) forward, for a sanity check
# ----------------------------------------------------------------------------- #
def survpath_reference(params, x_omic, wsi2d, *, dh):
    P = len(x_omic)
    hs = []
    for i, x in enumerate(x_omic):
        pr = params["snn"][i]
        h = _elu(x @ pr["w1"] + pr["b1"])
        h = _elu(h @ pr["w2"] + pr["b2"])
        hs.append(h)
    h_omic = jnp.concatenate(hs, axis=0)
    wsi_emb = wsi2d @ params["wsi_proj"]["w"] + params["wsi_proj"]["b"]
    tokens = jnp.concatenate([h_omic, wsi_emb], axis=0)
    a = params["attn"]
    xn = _ln(tokens, a["ln_g"], a["ln_b"])
    q = xn @ a["wq"] * (float(dh) ** -0.5)
    k = xn @ a["wk"]
    v = xn @ a["wv"]
    s = q @ k.T
    n = tokens.shape[0]
    ridx = jnp.arange(n)[:, None]
    cidx = jnp.arange(n)[None, :]
    s = jnp.where(jnp.logical_or(ridx < P, cidx < P), s, -1e30)
    mm = jax.nn.softmax(s, axis=-1) @ v
    f, pln, lg = params["ff"], params["post_ln"], params["logits"]
    h = _ln(mm, f["g"], f["b"])
    h = _gelu_tanh(h @ f["w1"] + f["b1"])
    h = h @ f["w2"] + f["b2"]
    y = _ln(h, pln["g"], pln["b"])
    paths = jnp.mean(y[:P], axis=0, keepdims=True)
    wsis = jnp.mean(y[P:], axis=0, keepdims=True)
    z = jnp.maximum(paths @ lg["w1p"] + wsis @ lg["w1w"] + lg["b1"], 0.0)
    return z @ lg["w2"] + lg["b2"]


# ----------------------------------------------------------------------------- #
# main
# ----------------------------------------------------------------------------- #
if __name__ == "__main__":
    # small shapes consistent with the module's forward (batch B = 1)
    omic_sizes = [16, 32, 48, 64, 80, 96]   # 6 pathways
    D = 64                                  # wsi_projection_dim == SNN hidden dim
    dh = D // 2                             # dim_head (heads=1)
    E = 128                                 # wsi_embedding_dim
    Nw = 32                                 # number of WSI patch features
    C = 4                                   # num_classes
    hdim = D // 4
    P = len(omic_sizes)

    key = jax.random.PRNGKey(0)
    pkey, dkey = jax.random.split(key)
    params = init_params(pkey, omic_sizes, D, dh, E, hdim, C)

    dkeys = jax.random.split(dkey, P + 1)
    x_omic = [jax.random.normal(dkeys[i], (1, omic_sizes[i]), jnp.float32)
              for i in range(P)]
    x_path = jax.random.normal(dkeys[P], (1, Nw, E), jnp.float32)

    P_pad = _round_up(P, 8)
    K_pad = _round_up(int(sum(omic_sizes)), 128)
    packed = pack_params(params, omic_sizes, P_pad=P_pad, K_pad=K_pad, D=D, dh=dh)
    forward = build_survpath_forward(omic_sizes, D=D, dh=dh, E=E, hdim=hdim, C=C, Nw=Nw)

    logits = jax.block_until_ready(forward(packed, x_omic, x_path))

    assert logits.shape == (1, C)
    assert bool(jnp.all(jnp.isfinite(logits)))

    # sanity check against a plain-JAX (f32) implementation of the same math;
    # tolerance accounts for bf16 matmul operands inside the kernel.
    ref = survpath_reference(params, x_omic, x_path.reshape(Nw, E), dh=dh)
    np.testing.assert_allclose(np.asarray(logits), np.asarray(ref),
                               rtol=8e-2, atol=2e-2)

    print("KERNEL_OK")
</pallas_src>

<mosaic_0001>
module attributes {stable_mosaic.version = 11 : i64} {
  func.func @kernel(%arg0: memref<8x384xf32, #tpu.memory_space<vmem>>, %arg1: memref<32x128xf32, #tpu.memory_space<vmem>>, %arg2: memref<384x64xbf16, #tpu.memory_space<vmem>>, %arg3: memref<8x64xf32, #tpu.memory_space<vmem>>, %arg4: memref<384x64xbf16, #tpu.memory_space<vmem>>, %arg5: memref<8x64xf32, #tpu.memory_space<vmem>>, %arg6: memref<128x64xbf16, #tpu.memory_space<vmem>>, %arg7: memref<3x64xf32, #tpu.memory_space<vmem>>, %arg8: memref<64x96xbf16, #tpu.memory_space<vmem>>, %arg9: memref<2x32x32xbf16, #tpu.memory_space<vmem>>, %arg10: memref<6x32xf32, #tpu.memory_space<vmem>>, %arg11: memref<40x40xf32, #tpu.memory_space<vmem>>, %arg12: memref<65x16xf32, #tpu.memory_space<vmem>>, %arg13: memref<17x4xf32, #tpu.memory_space<vmem>>, %arg14: memref<1x4xf32, #tpu.memory_space<vmem>>) attributes {dimension_semantics = [], scalar_prefetch = 0 : i64, scratch_operands = 0 : i64, tpu.core_type = #tpu.core_type<tc>} {
    %c0 = arith.constant 0 : index
    %c0_0 = arith.constant 0 : index
    %0 = vector.load %arg0[%c0, %c0_0] : memref<8x384xf32, #tpu.memory_space<vmem>>, vector<8x384xf32>
    %1 = arith.truncf %0 : vector<8x384xf32> to vector<8x384xbf16>
    %c0_1 = arith.constant 0 : index
    %c0_2 = arith.constant 0 : index
    %2 = vector.load %arg2[%c0_1, %c0_2] : memref<384x64xbf16, #tpu.memory_space<vmem>>, vector<384x64xbf16>
    %cst = arith.constant dense<0.000000e+00> : vector<8x64xf32>
    %3 = tpu.matmul %1, %2, %cst {dimension_numbers = #tpu.dot_dimension_numbers<[1], [0], [0], [1], [0, 0, 1, 1], [], []>} : vector<8x384xbf16>, vector<384x64xbf16>, vector<8x64xf32> -> vector<8x64xf32>
    %c0_3 = arith.constant 0 : index
    %c0_4 = arith.constant 0 : index
    %4 = vector.load %arg3[%c0_3, %c0_4] : memref<8x64xf32, #tpu.memory_space<vmem>>, vector<8x64xf32>
    %5 = arith.addf %3, %4 : vector<8x64xf32>
    %cst_5 = arith.constant 0.000000e+00 : f32
    %6 = vector.broadcast %cst_5 : f32 to vector<8x64xf32>
    %7 = arith.cmpf ogt, %5, %6 : vector<8x64xf32>
    %cst_6 = arith.constant 0.000000e+00 : f32
    %8 = vector.broadcast %cst_6 : f32 to vector<8x64xf32>
    %9 = arith.minimumf %5, %8 : vector<8x64xf32>
    %10 = math.exp %9 : vector<8x64xf32>
    %cst_7 = arith.constant 1.000000e+00 : f32
    %11 = vector.broadcast %cst_7 : f32 to vector<8x64xf32>
    %12 = arith.subf %10, %11 : vector<8x64xf32>
    %13 = arith.select %7, %5, %12 : vector<8x64xi1>, vector<8x64xf32>
    %14 = tpu.iota {dimensions = array<i32: 0>} : vector<8x384xi32>
    %15 = tpu.iota {dimensions = array<i32: 1>} : vector<8x384xi32>
    %c64_i32 = arith.constant 64 : i32
    %16 = vector.broadcast %c64_i32 : i32 to vector<8x384xi32>
    %17 = arith.muli %14, %16 : vector<8x384xi32>
    %18 = arith.cmpi sge, %15, %17 : vector<8x384xi32>
    %c64_i32_8 = arith.constant 64 : i32
    %19 = vector.broadcast %c64_i32_8 : i32 to vector<8x384xi32>
    %20 = arith.addi %17, %19 : vector<8x384xi32>
    %21 = arith.cmpi slt, %15, %20 : vector<8x384xi32>
    %22 = arith.andi %18, %21 : vector<8x384xi1>
    %23 = tpu.concatenate %13, %13, %13, %13, %13, %13 in 1 : vector<8x64xf32>, vector<8x64xf32>, vector<8x64xf32>, vector<8x64xf32>, vector<8x64xf32>, vector<8x64xf32> -> vector<8x384xf32>
    %cst_9 = arith.constant 0.000000e+00 : f32
    %24 = vector.broadcast %cst_9 : f32 to vector<8x384xf32>
    %25 = arith.select %22, %23, %24 : vector<8x384xi1>, vector<8x384xf32>
    %26 = arith.truncf %25 : vector<8x384xf32> to vector<8x384xbf16>
    %c0_10 = arith.constant 0 : index
    %c0_11 = arith.constant 0 : index
    %27 = vector.load %arg4[%c0_10, %c0_11] : memref<384x64xbf16, #tpu.memory_space<vmem>>, vector<384x64xbf16>
    %cst_12 = arith.constant dense<0.000000e+00> : vector<8x64xf32>
    %28 = tpu.matmul %26, %27, %cst_12 {dimension_numbers = #tpu.dot_dimension_numbers<[1], [0], [0], [1], [0, 0, 1, 1], [], []>} : vector<8x384xbf16>, vector<384x64xbf16>, vector<8x64xf32> -> vector<8x64xf32>
    %c0_13 = arith.constant 0 : index
    %c0_14 = arith.constant 0 : index
    %29 = vector.load %arg5[%c0_13, %c0_14] : memref<8x64xf32, #tpu.memory_space<vmem>>, vector<8x64xf32>
    %30 = arith.addf %28, %29 : vector<8x64xf32>
    %cst_15 = arith.constant 0.000000e+00 : f32
    %31 = vector.broadcast %cst_15 : f32 to vector<8x64xf32>
    %32 = arith.cmpf ogt, %30, %31 : vector<8x64xf32>
    %cst_16 = arith.constant 0.000000e+00 : f32
    %33 = vector.broadcast %cst_16 : f32 to vector<8x64xf32>
    %34 = arith.minimumf %30, %33 : vector<8x64xf32>
    %35 = math.exp %34 : vector<8x64xf32>
    %cst_17 = arith.constant 1.000000e+00 : f32
    %36 = vector.broadcast %cst_17 : f32 to vector<8x64xf32>
    %37 = arith.subf %35, %36 : vector<8x64xf32>
    %38 = arith.select %32, %30, %37 : vector<8x64xi1>, vector<8x64xf32>
    %c0_18 = arith.constant 0 : index
    %c0_19 = arith.constant 0 : index
    %39 = vector.load %arg1[%c0_18, %c0_19] : memref<32x128xf32, #tpu.memory_space<vmem>>, vector<32x128xf32>
    %40 = arith.truncf %39 : vector<32x128xf32> to vector<32x128xbf16>
    %c0_20 = arith.constant 0 : index
    %c0_21 = arith.constant 0 : index
    %41 = vector.load %arg6[%c0_20, %c0_21] : memref<128x64xbf16, #tpu.memory_space<vmem>>, vector<128x64xbf16>
    %cst_22 = arith.constant dense<0.000000e+00> : vector<32x64xf32>
    %42 = tpu.matmul %40, %41, %cst_22 {dimension_numbers = #tpu.dot_dimension_numbers<[1], [0], [0], [1], [0, 0, 1, 1], [], []>} : vector<32x128xbf16>, vector<128x64xbf16>, vector<32x64xf32> -> vector<32x64xf32>
    %c0_23 = arith.constant 0 : index
    %c0_24 = arith.constant 0 : index
    %43 = vector.load %arg7[%c0_23, %c0_24] : memref<3x64xf32, #tpu.memory_space<vmem>>, vector<1x64xf32>
    %44 = vector.broadcast %43 : vector<1x64xf32> to vector<32x64xf32>
    %45 = arith.addf %42, %44 : vector<32x64xf32>
    %46 = tpu.concatenate %38, %45 in 0 : vector<8x64xf32>, vector<32x64xf32> -> vector<40x64xf32>
    %c1 = arith.constant 1 : index
    %c0_25 = arith.constant 0 : index
    %47 = vector.load %arg7[%c1, %c0_25] : memref<3x64xf32, #tpu.memory_space<vmem>>, vector<1x64xf32>
    %c2 = arith.constant 2 : index
    %c0_26 = arith.constant 0 : index
    %48 = vector.load %arg7[%c2, %c0_26] : memref<3x64xf32, #tpu.memory_space<vmem>>, vector<1x64xf32>
    %cst_27 = arith.constant dense<0.000000e+00> : vector<40xf32>
    %49 = vector.multi_reduction <add>, %46, %cst_27 [1] : vector<40x64xf32> to vector<40xf32>
    %50 = vector.shape_cast %49 : vector<40xf32> to vector<40x1xf32>
    %cst_28 = arith.constant 6.400000e+01 : f32
    %51 = vector.broadcast %cst_28 : f32 to vector<40x1xf32>
    %52 = arith.divf %50, %51 : vector<40x1xf32>
    %53 = vector.broadcast %52 : vector<40x1xf32> to vector<40x64xf32>
    %54 = arith.subf %46, %53 : vector<40x64xf32>
    %55 = arith.mulf %54, %54 : vector<40x64xf32>
    %cst_29 = arith.constant dense<0.000000e+00> : vector<40xf32>
    %56 = vector.multi_reduction <add>, %55, %cst_29 [1] : vector<40x64xf32> to vector<40xf32>
    %57 = vector.shape_cast %56 : vector<40xf32> to vector<40x1xf32>
    %cst_30 = arith.constant 6.400000e+01 : f32
    %58 = vector.broadcast %cst_30 : f32 to vector<40x1xf32>
    %59 = arith.divf %57, %58 : vector<40x1xf32>
    %60 = vector.broadcast %52 : vector<40x1xf32> to vector<40x64xf32>
    %61 = arith.subf %46, %60 : vector<40x64xf32>
    %cst_31 = arith.constant 9.99999974E-6 : f32
    %62 = vector.broadcast %cst_31 : f32 to vector<40x1xf32>
    %63 = arith.addf %59, %62 : vector<40x1xf32>
    %64 = math.rsqrt %63 : vector<40x1xf32>
    %65 = vector.broadcast %64 : vector<40x1xf32> to vector<40x64xf32>
    %66 = arith.mulf %61, %65 : vector<40x64xf32>
    %67 = vector.broadcast %47 : vector<1x64xf32> to vector<40x64xf32>
    %68 = arith.mulf %66, %67 : vector<40x64xf32>
    %69 = vector.broadcast %48 : vector<1x64xf32> to vector<40x64xf32>
    %70 = arith.addf %68, %69 : vector<40x64xf32>
    %71 = arith.truncf %70 : vector<40x64xf32> to vector<40x64xbf16>
    %c0_32 = arith.constant 0 : index
    %c0_33 = arith.constant 0 : index
    %72 = vector.load %arg8[%c0_32, %c0_33] : memref<64x96xbf16, #tpu.memory_space<vmem>>, vector<64x96xbf16>
    %cst_34 = arith.constant dense<0.000000e+00> : vector<40x96xf32>
    %73 = tpu.matmul %71, %72, %cst_34 {dimension_numbers = #tpu.dot_dimension_numbers<[1], [0], [0], [1], [0, 0, 1, 1], [], []>} : vector<40x64xbf16>, vector<64x96xbf16>, vector<40x96xf32> -> vector<40x96xf32>
    %74 = vector.extract_strided_slice %73 {offsets = [0, 0], sizes = [40, 32], strides = [1, 1]} : vector<40x96xf32> to vector<40x32xf32>
    %75 = arith.truncf %74 : vector<40x32xf32> to vector<40x32xbf16>
    %76 = vector.extract_strided_slice %73 {offsets = [0, 32], sizes = [40, 32], strides = [1, 1]} : vector<40x96xf32> to vector<40x32xf32>
    %77 = arith.truncf %76 : vector<40x32xf32> to vector<40x32xbf16>
    %78 = vector.extract_strided_slice %73 {offsets = [0, 64], sizes = [40, 32], strides = [1, 1]} : vector<40x96xf32> to vector<40x32xf32>
    %79 = arith.truncf %78 : vector<40x32xf32> to vector<40x32xbf16>
    %cst_35 = arith.constant dense<0.000000e+00> : vector<40x40xf32>
    %80 = tpu.matmul %75, %77, %cst_35 {dimension_numbers = #tpu.dot_dimension_numbers<[1], [1], [0], [0], [0, 0, 1, 0], [], []>} : vector<40x32xbf16>, vector<40x32xbf16>, vector<40x40xf32> -> vector<40x40xf32>
    %c0_36 = arith.constant 0 : index
    %c0_37 = arith.constant 0 : index
    %81 = vector.load %arg11[%c0_36, %c0_37] : memref<40x40xf32, #tpu.memory_space<vmem>>, vector<40x40xf32>
    %82 = arith.addf %80, %81 : vector<40x40xf32>
    %cst_38 = arith.constant dense<0xFF800000> : vector<40xf32>
    %83 = vector.multi_reduction <maximumf>, %82, %cst_38 [1] : vector<40x40xf32> to vector<40xf32>
    %84 = vector.shape_cast %83 : vector<40xf32> to vector<40x1xf32>
    %85 = vector.broadcast %84 : vector<40x1xf32> to vector<40x40xf32>
    %86 = arith.subf %82, %85 : vector<40x40xf32>
    %87 = math.exp %86 : vector<40x40xf32>
    %cst_39 = arith.constant dense<0.000000e+00> : vector<40xf32>
    %88 = vector.multi_reduction <add>, %87, %cst_39 [1] : vector<40x40xf32> to vector<40xf32>
    %89 = vector.shape_cast %88 : vector<40xf32> to vector<40x1xf32>
    %90 = tpu.reciprocal %89 {approx = true} : vector<40x1xf32> -> vector<40x1xf32>
    %91 = vector.broadcast %90 : vector<40x1xf32> to vector<40x40xf32>
    %92 = arith.mulf %87, %91 : vector<40x40xf32>
    %93 = arith.truncf %92 : vector<40x40xf32> to vector<40x40xbf16>
    %cst_40 = arith.constant dense<0.000000e+00> : vector<40x32xf32>
    %94 = tpu.matmul %93, %79, %cst_40 {dimension_numbers = #tpu.dot_dimension_numbers<[1], [0], [0], [1], [0, 0, 1, 1], [], []>} : vector<40x40xbf16>, vector<40x32xbf16>, vector<40x32xf32> -> vector<40x32xf32>
    %c0_41 = arith.constant 0 : index
    %c0_42 = arith.constant 0 : index
    %95 = vector.load %arg10[%c0_41, %c0_42] : memref<6x32xf32, #tpu.memory_space<vmem>>, vector<1x32xf32>
    %c1_43 = arith.constant 1 : index
    %c0_44 = arith.constant 0 : index
    %96 = vector.load %arg10[%c1_43, %c0_44] : memref<6x32xf32, #tpu.memory_space<vmem>>, vector<1x32xf32>
    %cst_45 = arith.constant dense<0.000000e+00> : vector<40xf32>
    %97 = vector.multi_reduction <add>, %94, %cst_45 [1] : vector<40x32xf32> to vector<40xf32>
    %98 = vector.shape_cast %97 : vector<40xf32> to vector<40x1xf32>
    %cst_46 = arith.constant 3.200000e+01 : f32
    %99 = vector.broadcast %cst_46 : f32 to vector<40x1xf32>
    %100 = arith.divf %98, %99 : vector<40x1xf32>
    %101 = vector.broadcast %100 : vector<40x1xf32> to vector<40x32xf32>
    %102 = arith.subf %94, %101 : vector<40x32xf32>
    %103 = arith.mulf %102, %102 : vector<40x32xf32>
    %cst_47 = arith.constant dense<0.000000e+00> : vector<40xf32>
    %104 = vector.multi_reduction <add>, %103, %cst_47 [1] : vector<40x32xf32> to vector<40xf32>
    %105 = vector.shape_cast %104 : vector<40xf32> to vector<40x1xf32>
    %cst_48 = arith.constant 3.200000e+01 : f32
    %106 = vector.broadcast %cst_48 : f32 to vector<40x1xf32>
    %107 = arith.divf %105, %106 : vector<40x1xf32>
    %108 = vector.broadcast %100 : vector<40x1xf32> to vector<40x32xf32>
    %109 = arith.subf %94, %108 : vector<40x32xf32>
    %cst_49 = arith.constant 9.99999974E-6 : f32
    %110 = vector.broadcast %cst_49 : f32 to vector<40x1xf32>
    %111 = arith.addf %107, %110 : vector<40x1xf32>
    %112 = math.rsqrt %111 : vector<40x1xf32>
    %113 = vector.broadcast %112 : vector<40x1xf32> to vector<40x32xf32>
    %114 = arith.mulf %109, %113 : vector<40x32xf32>
    %115 = vector.broadcast %95 : vector<1x32xf32> to vector<40x32xf32>
    %116 = arith.mulf %114, %115 : vector<40x32xf32>
    %117 = vector.broadcast %96 : vector<1x32xf32> to vector<40x32xf32>
    %118 = arith.addf %116, %117 : vector<40x32xf32>
    %119 = arith.truncf %118 : vector<40x32xf32> to vector<40x32xbf16>
    %c0_50 = arith.constant 0 : index
    %c0_51 = arith.constant 0 : index
    %c0_52 = arith.constant 0 : index
    %120 = vector.load %arg9[%c0_50, %c0_51, %c0_52] : memref<2x32x32xbf16, #tpu.memory_space<vmem>>, vector<1x32x32xbf16>
    %121 = vector.shape_cast %120 : vector<1x32x32xbf16> to vector<32x32xbf16>
    %cst_53 = arith.constant dense<0.000000e+00> : vector<40x32xf32>
    %122 = tpu.matmul %119, %121, %cst_53 {dimension_numbers = #tpu.dot_dimension_numbers<[1], [0], [0], [1], [0, 0, 1, 1], [], []>} : vector<40x32xbf16>, vector<32x32xbf16>, vector<40x32xf32> -> vector<40x32xf32>
    %c2_54 = arith.constant 2 : index
    %c0_55 = arith.constant 0 : index
    %123 = vector.load %arg10[%c2_54, %c0_55] : memref<6x32xf32, #tpu.memory_space<vmem>>, vector<1x32xf32>
    %124 = vector.broadcast %123 : vector<1x32xf32> to vector<40x32xf32>
    %125 = arith.addf %122, %124 : vector<40x32xf32>
    %cst_56 = arith.constant 5.000000e-01 : f32
    %126 = vector.broadcast %cst_56 : f32 to vector<40x32xf32>
    %127 = arith.mulf %126, %125 : vector<40x32xf32>
    %cst_57 = arith.constant 4.471500e-02 : f32
    %128 = vector.broadcast %cst_57 : f32 to vector<40x32xf32>
    %129 = arith.mulf %128, %125 : vector<40x32xf32>
    %130 = arith.mulf %129, %125 : vector<40x32xf32>
    %131 = arith.mulf %130, %125 : vector<40x32xf32>
    %132 = arith.addf %125, %131 : vector<40x32xf32>
    %cst_58 = arith.constant 0.797884583 : f32
    %133 = vector.broadcast %cst_58 : f32 to vector<40x32xf32>
    %134 = arith.mulf %133, %132 : vector<40x32xf32>
    %135 = math.tanh %134 : vector<40x32xf32>
    %cst_59 = arith.constant 1.000000e+00 : f32
    %136 = vector.broadcast %cst_59 : f32 to vector<40x32xf32>
    %137 = arith.addf %136, %135 : vector<40x32xf32>
    %138 = arith.mulf %127, %137 : vector<40x32xf32>
    %139 = arith.truncf %138 : vector<40x32xf32> to vector<40x32xbf16>
    %c1_60 = arith.constant 1 : index
    %c0_61 = arith.constant 0 : index
    %c0_62 = arith.constant 0 : index
    %140 = vector.load %arg9[%c1_60, %c0_61, %c0_62] : memref<2x32x32xbf16, #tpu.memory_space<vmem>>, vector<1x32x32xbf16>
    %141 = vector.shape_cast %140 : vector<1x32x32xbf16> to vector<32x32xbf16>
    %cst_63 = arith.constant dense<0.000000e+00> : vector<40x32xf32>
    %142 = tpu.matmul %139, %141, %cst_63 {dimension_numbers = #tpu.dot_dimension_numbers<[1], [0], [0], [1], [0, 0, 1, 1], [], []>} : vector<40x32xbf16>, vector<32x32xbf16>, vector<40x32xf32> -> vector<40x32xf32>
    %c3 = arith.constant 3 : index
    %c0_64 = arith.constant 0 : index
    %143 = vector.load %arg10[%c3, %c0_64] : memref<6x32xf32, #tpu.memory_space<vmem>>, vector<1x32xf32>
    %144 = vector.broadcast %143 : vector<1x32xf32> to vector<40x32xf32>
    %145 = arith.addf %142, %144 : vector<40x32xf32>
    %c4 = arith.constant 4 : index
    %c0_65 = arith.constant 0 : index
    %146 = vector.load %arg10[%c4, %c0_65] : memref<6x32xf32, #tpu.memory_space<vmem>>, vector<1x32xf32>
    %c5 = arith.constant 5 : index
    %c0_66 = arith.constant 0 : index
    %147 = vector.load %arg10[%c5, %c0_66] : memref<6x32xf32, #tpu.memory_space<vmem>>, vector<1x32xf32>
    %cst_67 = arith.constant dense<0.000000e+00> : vector<40xf32>
    %148 = vector.multi_reduction <add>, %145, %cst_67 [1] : vector<40x32xf32> to vector<40xf32>
    %149 = vector.shape_cast %148 : vector<40xf32> to vector<40x1xf32>
    %cst_68 = arith.constant 3.200000e+01 : f32
    %150 = vector.broadcast %cst_68 : f32 to vector<40x1xf32>
    %151 = arith.divf %149, %150 : vector<40x1xf32>
    %152 = vector.broadcast %151 : vector<40x1xf32> to vector<40x32xf32>
    %153 = arith.subf %145, %152 : vector<40x32xf32>
    %154 = arith.mulf %153, %153 : vector<40x32xf32>
    %cst_69 = arith.constant dense<0.000000e+00> : vector<40xf32>
    %155 = vector.multi_reduction <add>, %154, %cst_69 [1] : vector<40x32xf32> to vector<40xf32>
    %156 = vector.shape_cast %155 : vector<40xf32> to vector<40x1xf32>
    %cst_70 = arith.constant 3.200000e+01 : f32
    %157 = vector.broadcast %cst_70 : f32 to vector<40x1xf32>
    %158 = arith.divf %156, %157 : vector<40x1xf32>
    %159 = vector.broadcast %151 : vector<40x1xf32> to vector<40x32xf32>
    %160 = arith.subf %145, %159 : vector<40x32xf32>
    %cst_71 = arith.constant 9.99999974E-6 : f32
    %161 = vector.broadcast %cst_71 : f32 to vector<40x1xf32>
    %162 = arith.addf %158, %161 : vector<40x1xf32>
    %163 = math.rsqrt %162 : vector<40x1xf32>
    %164 = vector.broadcast %163 : vector<40x1xf32> to vector<40x32xf32>
    %165 = arith.mulf %160, %164 : vector<40x32xf32>
    %166 = vector.broadcast %146 : vector<1x32xf32> to vector<40x32xf32>
    %167 = arith.mulf %165, %166 : vector<40x32xf32>
    %168 = vector.broadcast %147 : vector<1x32xf32> to vector<40x32xf32>
    %169 = arith.addf %167, %168 : vector<40x32xf32>
    %170 = tpu.iota {dimensions = array<i32: 0>} : vector<40x32xi32>
    %c6_i32 = arith.constant 6 : i32
    %171 = vector.broadcast %c6_i32 : i32 to vector<40x32xi32>
    %172 = arith.cmpi slt, %170, %171 : vector<40x32xi32>
    %173 = arith.extui %172 : vector<40x32xi1> to vector<40x32xi32>
    %174 = arith.sitofp %173 : vector<40x32xi32> to vector<40x32xf32>
    %c8_i32 = arith.constant 8 : i32
    %175 = vector.broadcast %c8_i32 : i32 to vector<40x32xi32>
    %176 = arith.cmpi sge, %170, %175 : vector<40x32xi32>
    %c40_i32 = arith.constant 40 : i32
    %177 = vector.broadcast %c40_i32 : i32 to vector<40x32xi32>
    %178 = arith.cmpi slt, %170, %177 : vector<40x32xi32>
    %179 = arith.andi %176, %178 : vector<40x32xi1>
    %180 = arith.extui %179 : vector<40x32xi1> to vector<40x32xi32>
    %181 = arith.sitofp %180 : vector<40x32xi32> to vector<40x32xf32>
    %182 = arith.mulf %169, %174 : vector<40x32xf32>
    %cst_72 = arith.constant dense<0.000000e+00> : vector<32xf32>
    %183 = vector.multi_reduction <add>, %182, %cst_72 [0] : vector<40x32xf32> to vector<32xf32>
    %184 = vector.shape_cast %183 : vector<32xf32> to vector<1x32xf32>
    %cst_73 = arith.constant 0.166666672 : f32
    %185 = vector.broadcast %cst_73 : f32 to vector<1x32xf32>
    %186 = arith.mulf %184, %185 : vector<1x32xf32>
    %187 = arith.mulf %169, %181 : vector<40x32xf32>
    %cst_74 = arith.constant dense<0.000000e+00> : vector<32xf32>
    %188 = vector.multi_reduction <add>, %187, %cst_74 [0] : vector<40x32xf32> to vector<32xf32>
    %189 = vector.shape_cast %188 : vector<32xf32> to vector<1x32xf32>
    %cst_75 = arith.constant 3.125000e-02 : f32
    %190 = vector.broadcast %cst_75 : f32 to vector<1x32xf32>
    %191 = arith.mulf %189, %190 : vector<1x32xf32>
    %192 = tpu.concatenate %186, %191 in 1 : vector<1x32xf32>, vector<1x32xf32> -> vector<1x64xf32>
    %c0_76 = arith.constant 0 : index
    %c0_77 = arith.constant 0 : index
    %193 = vector.load %arg12[%c0_76, %c0_77] : memref<65x16xf32, #tpu.memory_space<vmem>>, vector<64x16xf32>
    %cst_78 = arith.constant dense<0.000000e+00> : vector<1x16xf32>
    %194 = tpu.matmul %192, %193, %cst_78 {dimension_numbers = #tpu.dot_dimension_numbers<[1], [0], [0], [1], [0, 0, 1, 1], [], []>} : vector<1x64xf32>, vector<64x16xf32>, vector<1x16xf32> -> vector<1x16xf32>
    %c64 = arith.constant 64 : index
    %c0_79 = arith.constant 0 : index
    %195 = vector.load %arg12[%c64, %c0_79] : memref<65x16xf32, #tpu.memory_space<vmem>>, vector<1x16xf32>
    %196 = arith.addf %194, %195 : vector<1x16xf32>
    %cst_80 = arith.constant 0.000000e+00 : f32
    %197 = vector.broadcast %cst_80 : f32 to vector<1x16xf32>
    %198 = arith.maximumf %196, %197 : vector<1x16xf32>
    %c0_81 = arith.constant 0 : index
    %c0_82 = arith.constant 0 : index
    %199 = vector.load %arg13[%c0_81, %c0_82] : memref<17x4xf32, #tpu.memory_space<vmem>>, vector<16x4xf32>
    %cst_83 = arith.constant dense<0.000000e+00> : vector<1x4xf32>
    %200 = tpu.matmul %198, %199, %cst_83 {dimension_numbers = #tpu.dot_dimension_numbers<[1], [0], [0], [1], [0, 0, 1, 1], [], []>} : vector<1x16xf32>, vector<16x4xf32>, vector<1x4xf32> -> vector<1x4xf32>
    %c16 = arith.constant 16 : index
    %c0_84 = arith.constant 0 : index
    %201 = vector.load %arg13[%c16, %c0_84] : memref<17x4xf32, #tpu.memory_space<vmem>>, vector<1x4xf32>
    %202 = arith.addf %200, %201 : vector<1x4xf32>
    %c0_85 = arith.constant 0 : index
    %c0_86 = arith.constant 0 : index
    %203 = vector.load %arg14[%c0_85, %c0_86] : memref<1x4xf32, #tpu.memory_space<vmem>>, vector<1x4xf32>
    tpu.vector_store %arg14[%c0_85, %c0_86], %202 {strides = array<i32>} : memref<1x4xf32, #tpu.memory_space<vmem>>, vector<1x4xf32>,
    return
  }
}

</mosaic_0001>

<llo_original>
// kernel: forward.1
$region0: #{forward.1}
  #allocation0 [shape = 'u32[]', space=smem, size = 0x4, offset = 0x4, fixed_abs, tag = 'smem constant byte address 0x4 - core index']
  #allocation1 [shape = 'u32[144,128]{1,0:T(1,128)}', space=vmem, size = 0x12000, scoped, tag = 'internal scratch']
  %s0 = inlined_call_operand.vmem [shape: f32[8,384], index: 0, kind: input, shape index: {}]
  %s1 = inlined_call_operand.vmem [shape: f32[32,128], index: 1, kind: input, shape index: {}]
  %s2 = inlined_call_operand.vmem [shape: bf16[384,64], index: 2, kind: input, shape index: {}]
  %s3 = inlined_call_operand.vmem [shape: f32[8,64], index: 3, kind: input, shape index: {}]
  %s4 = inlined_call_operand.vmem [shape: bf16[384,64], index: 4, kind: input, shape index: {}]
  %s5 = inlined_call_operand.vmem [shape: f32[8,64], index: 5, kind: input, shape index: {}]
  %s6 = inlined_call_operand.vmem [shape: bf16[128,64], index: 6, kind: input, shape index: {}]
  %s7 = inlined_call_operand.vmem [shape: f32[3,64], index: 7, kind: input, shape index: {}]
  %s8 = inlined_call_operand.vmem [shape: bf16[64,96], index: 8, kind: input, shape index: {}]
  %s9 = inlined_call_operand.vmem [shape: bf16[2,32,32], index: 9, kind: input, shape index: {}]
  %s10 = inlined_call_operand.vmem [shape: f32[6,32], index: 10, kind: input, shape index: {}]
  %s11 = inlined_call_operand.vmem [shape: f32[40,40], index: 11, kind: input, shape index: {}]
  %s12 = inlined_call_operand.vmem [shape: f32[65,16], index: 12, kind: input, shape index: {}]
  %s13 = inlined_call_operand.vmem [shape: f32[17,4], index: 13, kind: input, shape index: {}]
  %s14 = inlined_call_operand.hbm [shape: f32[1,4], index: 14, kind: output, shape index: {}]
  %s15 = sld [smem:[#allocation0]]
  $region66: #{forward.1} parent=0
    _
  %s17 = ssub.s32 1, %s15
  %s18 = scalar_select 0, %s17, %s15
  $region1: #{forward.1} parent=0
    #allocation2 [shape = 'u8[512]{0}', space=vmem, size = 0x400, scoped, tag = 'output window, operand 0, single buffered']
    #allocation3 [shape = 's32[1]{0}', space=sflag, size = 0x4, scoped, tag = 'scoped memory for forward.1']
    %19 = vsyncpa [#allocation3], 0
    // Predicated region
    $region2: #{forward.1} parent=1 // pred_check
      _
    $region3: #{forward.1} parent=1 // pred_check_branch
      %21 = sbr.rel (0) target = $region5
    $region4: #{forward.1} parent=1 // pred_region
      _
    $region5: #{forward.1} parent=1 // pred_fallthru
      _
    // Predicated region
    $region6: #{forward.1} parent=1 // pred_check
      _
    $region7: #{forward.1} parent=1 // pred_check_branch
      %23 = sbr.rel (0) target = $region9
    $region8: #{forward.1} parent=1 // pred_region
      _
    $region9: #{forward.1} parent=1 // pred_fallthru
      _
    // Predicated region
    $region10: #{forward.1} parent=1 // pred_check
      _
    $region11: #{forward.1} parent=1 // pred_check_branch
      %25 = sbr.rel (0) target = $region13
    $region12: #{forward.1} parent=1 // pred_region
      _
    $region13: #{forward.1} parent=1 // pred_fallthru
      _
    // Predicated region
    $region14: #{forward.1} parent=1 // pred_check
      _
    $region15: #{forward.1} parent=1 // pred_check_branch
      %27 = sbr.rel (0) target = $region17
    $region16: #{forward.1} parent=1 // pred_region
      _
    $region17: #{forward.1} parent=1 // pred_fallthru
      _
    // Predicated region
    $region18: #{forward.1} parent=1 // pred_check
      _
    $region19: #{forward.1} parent=1 // pred_check_branch
      %29 = sbr.rel (0) target = $region21
    $region20: #{forward.1} parent=1 // pred_region
      _
    $region21: #{forward.1} parent=1 // pred_fallthru
      _
    // Predicated region
    $region22: #{forward.1} parent=1 // pred_check
      _
    $region23: #{forward.1} parent=1 // pred_check_branch
      %31 = sbr.rel (0) target = $region25
    $region24: #{forward.1} parent=1 // pred_region
      _
    $region25: #{forward.1} parent=1 // pred_fallthru
      _
    // Predicated region
    $region26: #{forward.1} parent=1 // pred_check
      _
    $region27: #{forward.1} parent=1 // pred_check_branch
      %33 = sbr.rel (0) target = $region29
    $region28: #{forward.1} parent=1 // pred_region
      _
    $region29: #{forward.1} parent=1 // pred_fallthru
      _
    // Predicated region
    $region30: #{forward.1} parent=1 // pred_check
      _
    $region31: #{forward.1} parent=1 // pred_check_branch
      %35 = sbr.rel (0) target = $region33
    $region32: #{forward.1} parent=1 // pred_region
      _
    $region33: #{forward.1} parent=1 // pred_fallthru
      _
    // Predicated region
    $region34: #{forward.1} parent=1 // pred_check
      _
    $region35: #{forward.1} parent=1 // pred_check_branch
      %37 = sbr.rel (0) target = $region37
    $region36: #{forward.1} parent=1 // pred_region
      _
    $region37: #{forward.1} parent=1 // pred_fallthru
      _
    // Predicated region
    $region38: #{forward.1} parent=1 // pred_check
      _
    $region39: #{forward.1} parent=1 // pred_check_branch
      %39 = sbr.rel (0) target = $region41
    $region40: #{forward.1} parent=1 // pred_region
      _
    $region41: #{forward.1} parent=1 // pred_fallthru
      _
    // Predicated region
    $region42: #{forward.1} parent=1 // pred_check
      _
    $region43: #{forward.1} parent=1 // pred_check_branch
      %41 = sbr.rel (0) target = $region45
    $region44: #{forward.1} parent=1 // pred_region
      _
    $region45: #{forward.1} parent=1 // pred_fallthru
      _
    // Predicated region
    $region46: #{forward.1} parent=1 // pred_check
      _
    $region47: #{forward.1} parent=1 // pred_check_branch
      %43 = sbr.rel (0) target = $region49
    $region48: #{forward.1} parent=1 // pred_region
      _
    $region49: #{forward.1} parent=1 // pred_fallthru
      _
    // Predicated region
    $region50: #{forward.1} parent=1 // pred_check
      _
    $region51: #{forward.1} parent=1 // pred_check_branch
      %45 = sbr.rel (0) target = $region53
    $region52: #{forward.1} parent=1 // pred_region
      _
    $region53: #{forward.1} parent=1 // pred_fallthru
      _
    // Predicated region
    $region54: #{forward.1} parent=1 // pred_check
      _
    $region55: #{forward.1} parent=1 // pred_check_branch
      %47 = sbr.rel (0) target = $region57
    $region56: #{forward.1} parent=1 // pred_region
      _
    $region57: #{forward.1} parent=1 // pred_fallthru
      _
    %v49 = vld [vmem:[%s0] sm:$0xff]
    %v50 = vld [vmem:[%s0 + $0x8] sm:$0xff]
    %v51 = vld [vmem:[%s0 + $0x10] sm:$0xff]
    %v52 = vpack.c.bf16 %v49, %v49
    %v53 = vpack.c.bf16 %v50, %v50
    %v54 = vpack.c.bf16 %v51, %v51
    %v55 = vld [vmem:[%s2] sm:$0xf]
    %v56 = vld [vmem:[%s2 + $0x4] sm:$0xf]
    %v57 = vld [vmem:[%s2 + $0x8] sm:$0xf]
    %v58 = vld [vmem:[%s2 + $0xc] sm:$0xf]
    %v59 = vld [vmem:[%s2 + $0x10] sm:$0xf]
    %v60 = vld [vmem:[%s2 + $0x14] sm:$0xf]
    %v61 = vld [vmem:[%s2 + $0x18] sm:$0xf]
    %v62 = vld [vmem:[%s2 + $0x1c] sm:$0xf]
    %v63 = vld [vmem:[%s2 + $0x20] sm:$0xf]
    %v64 = vld [vmem:[%s2 + $0x24] sm:$0xf]
    %v65 = vld [vmem:[%s2 + $0x28] sm:$0xf]
    %v66 = vld [vmem:[%s2 + $0x2c] sm:$0xf]
    %v67 = vld [vmem:[%s2 + $0x30] sm:$0xf]
    %v68 = vld [vmem:[%s2 + $0x34] sm:$0xf]
    %v69 = vld [vmem:[%s2 + $0x38] sm:$0xf]
    %v70 = vld [vmem:[%s2 + $0x3c] sm:$0xf]
    %v71 = vld [vmem:[%s2 + $0x40] sm:$0xf]
    %v72 = vld [vmem:[%s2 + $0x44] sm:$0xf]
    %v73 = vld [vmem:[%s2 + $0x48] sm:$0xf]
    %v74 = vld [vmem:[%s2 + $0x4c] sm:$0xf]
    %v75 = vld [vmem:[%s2 + $0x50] sm:$0xf]
    %v76 = vld [vmem:[%s2 + $0x54] sm:$0xf]
    %v77 = vld [vmem:[%s2 + $0x58] sm:$0xf]
    %v78 = vld [vmem:[%s2 + $0x5c] sm:$0xf]
    %v79 = vld [vmem:[%s2 + $0x60] sm:$0xf]
    %v80 = vld [vmem:[%s2 + $0x64] sm:$0xf]
    %v81 = vld [vmem:[%s2 + $0x68] sm:$0xf]
    %v82 = vld [vmem:[%s2 + $0x6c] sm:$0xf]
    %v83 = vld [vmem:[%s2 + $0x70] sm:$0xf]
    %v84 = vld [vmem:[%s2 + $0x74] sm:$0xf]
    %v85 = vld [vmem:[%s2 + $0x78] sm:$0xf]
    %v86 = vld [vmem:[%s2 + $0x7c] sm:$0xf]
    %v87 = vld [vmem:[%s2 + $0x80] sm:$0xf]
    %v88 = vld [vmem:[%s2 + $0x84] sm:$0xf]
    %v89 = vld [vmem:[%s2 + $0x88] sm:$0xf]
    %v90 = vld [vmem:[%s2 + $0x8c] sm:$0xf]
    %v91 = vld [vmem:[%s2 + $0x90] sm:$0xf]
    %v92 = vld [vmem:[%s2 + $0x94] sm:$0xf]
    %v93 = vld [vmem:[%s2 + $0x98] sm:$0xf]
    %v94 = vld [vmem:[%s2 + $0x9c] sm:$0xf]
    %v95 = vld [vmem:[%s2 + $0xa0] sm:$0xf]
    %v96 = vld [vmem:[%s2 + $0xa4] sm:$0xf]
    %v97 = vld [vmem:[%s2 + $0xa8] sm:$0xf]
    %v98 = vld [vmem:[%s2 + $0xac] sm:$0xf]
    %v99 = vld [vmem:[%s2 + $0xb0] sm:$0xf]
    %v100 = vld [vmem:[%s2 + $0xb4] sm:$0xf]
    %v101 = vld [vmem:[%s2 + $0xb8] sm:$0xf]
    %v102 = vld [vmem:[%s2 + $0xbc] sm:$0xf]
    %v103 = vld [vmem:[%s3] sm:$0xff]
    %v152 = vunpack.c.l.b16 %v55
    %v153 = vunpack.c.l.b16 %v56
    %v154 = vunpack.c.l.b16 %v57
    %v155 = vunpack.c.l.b16 %v58
    %v156 = vunpack.c.l.b16 %v59
    %v157 = vunpack.c.l.b16 %v60
    %v158 = vunpack.c.l.b16 %v61
    %v159 = vunpack.c.l.b16 %v62
    %v160 = vunpack.c.l.b16 %v63
    %v161 = vunpack.c.l.b16 %v64
    %v162 = vunpack.c.l.b16 %v65
    %v163 = vunpack.c.l.b16 %v66
    %v164 = vunpack.c.l.b16 %v67
    %v165 = vunpack.c.l.b16 %v68
    %v166 = vunpack.c.l.b16 %v69
    %v167 = vunpack.c.l.b16 %v70
    %v168 = vunpack.c.l.b16 %v71
    %v169 = vunpack.c.l.b16 %v72
    %v170 = vunpack.c.l.b16 %v73
    %v171 = vunpack.c.l.b16 %v74
    %v172 = vunpack.c.l.b16 %v75
    %v173 = vunpack.c.l.b16 %v76
    %v174 = vunpack.c.l.b16 %v77
    %v175 = vunpack.c.l.b16 %v78
    %v176 = vunpack.c.l.b16 %v79
    %v177 = vunpack.c.l.b16 %v80
    %v178 = vunpack.c.l.b16 %v81
    %v179 = vunpack.c.l.b16 %v82
    %v180 = vunpack.c.l.b16 %v83
    %v181 = vunpack.c.l.b16 %v84
    %v182 = vunpack.c.l.b16 %v85
    %v183 = vunpack.c.l.b16 %v86
    %v184 = vunpack.c.l.b16 %v87
    %v185 = vunpack.c.l.b16 %v88
    %v186 = vunpack.c.l.b16 %v89
    %v187 = vunpack.c.l.b16 %v90
    %v188 = vunpack.c.l.b16 %v91
    %v189 = vunpack.c.l.b16 %v92
    %v190 = vunpack.c.l.b16 %v93
    %v191 = vunpack.c.l.b16 %v94
    %v192 = vunpack.c.l.b16 %v95
    %v193 = vunpack.c.l.b16 %v96
    %v194 = vunpack.c.l.b16 %v97
    %v195 = vunpack.c.l.b16 %v98
    %v196 = vunpack.c.l.b16 %v99
    %v197 = vunpack.c.l.b16 %v100
    %v198 = vunpack.c.l.b16 %v101
    %v199 = vunpack.c.l.b16 %v102
    %v200 = vpack.c.b16 %v153, %v152
    %v201 = vpack.c.b16 %v155, %v154
    %v202 = vpack.c.b16 %v157, %v156
    %v203 = vpack.c.b16 %v159, %v158
    %v204 = vpack.c.b16 %v161, %v160
    %v205 = vpack.c.b16 %v163, %v162
    %v206 = vpack.c.b16 %v165, %v164
    %v207 = vpack.c.b16 %v167, %v166
    %v208 = vpack.c.b16 %v169, %v168
    %v209 = vpack.c.b16 %v171, %v170
    %v210 = vpack.c.b16 %v173, %v172
    %v211 = vpack.c.b16 %v175, %v174
    %v212 = vpack.c.b16 %v177, %v176
    %v213 = vpack.c.b16 %v179, %v178
    %v214 = vpack.c.b16 %v181, %v180
    %v215 = vpack.c.b16 %v183, %v182
    %v216 = vpack.c.b16 %v185, %v184
    %v217 = vpack.c.b16 %v187, %v186
    %v218 = vpack.c.b16 %v189, %v188
    %v219 = vpack.c.b16 %v191, %v190
    %v220 = vpack.c.b16 %v193, %v192
    %v221 = vpack.c.b16 %v195, %v194
    %v222 = vpack.c.b16 %v197, %v196
    %v223 = vpack.c.b16 %v199, %v198
    %248 = vmatprep.subr.bf16.mxu0 0
    %249 = vmatpush1.bf16.msra.mxu0 %v200
    %250 = vmatprep.subr.bf16.mxu0 0
    %251 = vmatpush1.bf16.msra.mxu0 %v201
    %252 = vmatprep.subr.bf16.mxu0 0
    %253 = vmatpush1.bf16.msra.mxu0 %v202
    %254 = vmatprep.subr.bf16.mxu0 0
    %255 = vmatpush1.bf16.msra.mxu0 %v203
    %256 = vmatprep.subr.bf16.mxu0 0
    %257 = vmatpush1.bf16.msra.mxu0 %v204
    %258 = vmatprep.subr.bf16.mxu0 0
    %259 = vmatpush1.bf16.msra.mxu0 %v205
    %260 = vmatprep.subr.bf16.mxu0 0
    %261 = vmatpush1.bf16.msra.mxu0 %v206
    %262 = vmatprep.subr.bf16.mxu0 0
    %263 = vmatpush1.bf16.msra.mxu0 %v207
    %264 = vmatprep.subr.bf16.mxu0 0
    %265 = vmatpush1.bf16.msra.mxu0 %v208
    %266 = vmatprep.subr.bf16.mxu0 0
    %267 = vmatpush1.bf16.msra.mxu0 %v209
    %268 = vmatprep.subr.bf16.mxu0 0
    %269 = vmatpush1.bf16.msra.mxu0 %v210
    %270 = vmatprep.subr.bf16.mxu0 0
    %271 = vmatpush1.bf16.msra.mxu0 %v211
    %272 = vmatprep.subr.bf16.mxu0 0
    %273 = vmatpush1.bf16.msra.mxu0 %v212
    %274 = vmatprep.subr.bf16.mxu0 0
    %275 = vmatpush1.bf16.msra.mxu0 %v213
    %276 = vmatprep.subr.bf16.mxu0 0
    %277 = vmatpush1.bf16.msra.mxu0 %v214
    %278 = vmatprep.subr.bf16.mxu0 0
    %279 = vmatpush1.bf16.msra.mxu0 %v215
    %280 = vmatprep.mubr.bf16.mxu0 %v53
    %281 = vmatmul.mubr.bf16.gmra.mrb[0].mxu0 %v52
    %v282 = vpop.f32.mrb[0].mxu0
    %v283 = vadd.f32 %v103, %v282
    %v284 = vpop.f32.mrb[0].mxu0
    %v285 = vpop.f32.mrb[0].mxu0
    %v286 = vpop.f32.mrb[0].mxu0
    %287 = vdwg.mxu0
    %288 = vmatprep.subr.bf16.mxu0 0
    %289 = vmatpush1.bf16.msra.mxu0 %v216
    %290 = vmatprep.subr.bf16.mxu0 0
    %291 = vmatpush1.bf16.msra.mxu0 %v217
    %292 = vmatprep.subr.bf16.mxu0 0
    %293 = vmatpush1.bf16.msra.mxu0 %v218
    %294 = vmatprep.subr.bf16.mxu0 0
    %295 = vmatpush1.bf16.msra.mxu0 %v219
    %296 = vmatprep.subr.bf16.mxu0 0
    %297 = vmatpush1.bf16.msra.mxu0 %v220
    %298 = vmatprep.subr.bf16.mxu0 0
    %299 = vmatpush1.bf16.msra.mxu0 %v221
    %300 = vmatprep.subr.bf16.mxu0 0
    %301 = vmatpush1.bf16.msra.mxu0 %v222
    %302 = vmatprep.subr.bf16.mxu0 0
    %303 = vmatpush1.bf16.msra.mxu0 %v223
    %304 = vmatprep.subr.bf16.mxu0 0
    %305 = vmatpush1.bf16.msra.mxu0 0
    %306 = vmatprep.subr.bf16.mxu0 0
    %307 = vmatpush1.bf16.msra.mxu0 0
    %308 = vmatprep.subr.bf16.mxu0 0
    %309 = vmatpush1.bf16.msra.mxu0 0
    %310 = vmatprep.subr.bf16.mxu0 0
    %311 = vmatpush1.bf16.msra.mxu0 0
    %312 = vmatprep.subr.bf16.mxu0 0
    %313 = vmatpush1.bf16.msra.mxu0 0
    %314 = vmatprep.subr.bf16.mxu0 0
    %315 = vmatpush1.bf16.msra.mxu0 0
    %316 = vmatprep.subr.bf16.mxu0 0
    %317 = vmatpush1.bf16.msra.mxu0 0
    %318 = vmatprep.subr.bf16.mxu0 0
    %319 = vmatpush1.bf16.msra.mxu0 0
    %320 = vmatprep.mubr.bf16.mxu0 0
    %321 = vmatmul.mubr.bf16.gmra.mrb[0].mxu0 %v54
    %v322 = vpop.f32.mrb[0].mxu0
    %v323 = vadd.f32 %v283, %v322
    %v324 = vpop.f32.mrb[0].mxu0
    %v325 = vpop.f32.mrb[0].mxu0
    %v326 = vpop.f32.mrb[0].mxu0
    %327 = vdwg.mxu0
    %vm328 = vcmp.gt.f32.partialorder %v323, 0.0
    %v329 = vmin.f32 %v323, 0.0
    %v330 = vmul.f32 %v329, 1.442695
    %v331 = vpow.pop %v330
    %v332 = vsub.f32 %v331, 1.0
    %v333 = vsel %vm328, %v323, %v332
    %v334 = vlaneseq
    %v335 = vshrl.u32 %v334, 7
    %v336 = vlaneseq
    %v337 = vand.u32 %v336, 127
    %v338 = vadd.s32 %v337, 128
    %v339 = vadd.s32 %v337, 256
    %v340 = vmul.u32 %v335, 64
    %vm341 = vcmp.ge.s32.totalorder %v337, %v340
    %vm342 = vcmp.ge.s32.totalorder %v338, %v340
    %vm343 = vcmp.ge.s32.totalorder %v339, %v340
    %v344 = vadd.s32 %v340, 64
    %vm345 = vcmp.lt.s32.totalorder %v337, %v344
    %vm346 = vcmp.lt.s32.totalorder %v338, %v344
    %vm347 = vcmp.lt.s32.totalorder %v339, %v344
    %vm348 = vmand %vm341, %vm345
    %vm349 = vmand %vm342, %vm346
    %vm350 = vmand %vm343, %vm347
    %352 = vrot.lane.b32.xlu0 %v333, 64
    %v353 = vpop.permute.xlu0 %352
    %vm355 = vcmask 523264
    %v356 = vsel %vm355, %v333, %v353
    %v357 = vsel %vm348, %v356, 0.0
    %v358 = vsel %vm349, %v356, 0.0
    %v359 = vsel %vm350, %v356, 0.0
    %v360 = vpack.c.bf16 %v357, %v357
    %v361 = vpack.c.bf16 %v358, %v358
    %v362 = vpack.c.bf16 %v359, %v359
    %v363 = vld [vmem:[%s4] sm:$0xf]
    %v364 = vld [vmem:[%s4 + $0x4] sm:$0xf]
    %v365 = vld [vmem:[%s4 + $0x8] sm:$0xf]
    %v366 = vld [vmem:[%s4 + $0xc] sm:$0xf]
    %v367 = vld [vmem:[%s4 + $0x10] sm:$0xf]
    %v368 = vld [vmem:[%s4 + $0x14] sm:$0xf]
    %v369 = vld [vmem:[%s4 + $0x18] sm:$0xf]
    %v370 = vld [vmem:[%s4 + $0x1c] sm:$0xf]
    %v371 = vld [vmem:[%s4 + $0x20] sm:$0xf]
    %v372 = vld [vmem:[%s4 + $0x24] sm:$0xf]
    %v373 = vld [vmem:[%s4 + $0x28] sm:$0xf]
    %v374 = vld [vmem:[%s4 + $0x2c] sm:$0xf]
    %v375 = vld [vmem:[%s4 + $0x30] sm:$0xf]
    %v376 = vld [vmem:[%s4 + $0x34] sm:$0xf]
    %v377 = vld [vmem:[%s4 + $0x38] sm:$0xf]
    %v378 = vld [vmem:[%s4 + $0x3c] sm:$0xf]
    %v379 = vld [vmem:[%s4 + $0x40] sm:$0xf]
    %v380 = vld [vmem:[%s4 + $0x44] sm:$0xf]
    %v381 = vld [vmem:[%s4 + $0x48] sm:$0xf]
    %v382 = vld [vmem:[%s4 + $0x4c] sm:$0xf]
    %v383 = vld [vmem:[%s4 + $0x50] sm:$0xf]
    %v384 = vld [vmem:[%s4 + $0x54] sm:$0xf]
    %v385 = vld [vmem:[%s4 + $0x58] sm:$0xf]
    %v386 = vld [vmem:[%s4 + $0x5c] sm:$0xf]
    %v387 = vld [vmem:[%s4 + $0x60] sm:$0xf]
    %v388 = vld [vmem:[%s4 + $0x64] sm:$0xf]
    %v389 = vld [vmem:[%s4 + $0x68] sm:$0xf]
    %v390 = vld [vmem:[%s4 + $0x6c] sm:$0xf]
    %v391 = vld [vmem:[%s4 + $0x70] sm:$0xf]
    %v392 = vld [vmem:[%s4 + $0x74] sm:$0xf]
    %v393 = vld [vmem:[%s4 + $0x78] sm:$0xf]
    %v394 = vld [vmem:[%s4 + $0x7c] sm:$0xf]
    %v395 = vld [vmem:[%s4 + $0x80] sm:$0xf]
    %v396 = vld [vmem:[%s4 + $0x84] sm:$0xf]
    %v397 = vld [vmem:[%s4 + $0x88] sm:$0xf]
    %v398 = vld [vmem:[%s4 + $0x8c] sm:$0xf]
    %v399 = vld [vmem:[%s4 + $0x90] sm:$0xf]
    %v400 = vld [vmem:[%s4 + $0x94] sm:$0xf]
    %v401 = vld [vmem:[%s4 + $0x98] sm:$0xf]
    %v402 = vld [vmem:[%s4 + $0x9c] sm:$0xf]
    %v403 = vld [vmem:[%s4 + $0xa0] sm:$0xf]
    %v404 = vld [vmem:[%s4 + $0xa4] sm:$0xf]
    %v405 = vld [vmem:[%s4 + $0xa8] sm:$0xf]
    %v406 = vld [vmem:[%s4 + $0xac] sm:$0xf]
    %v407 = vld [vmem:[%s4 + $0xb0] sm:$0xf]
    %v408 = vld [vmem:[%s4 + $0xb4] sm:$0xf]
    %v409 = vld [vmem:[%s4 + $0xb8] sm:$0xf]
    %v410 = vld [vmem:[%s4 + $0xbc] sm:$0xf]
    %v411 = vld [vmem:[%s5] sm:$0xff]
    %v460 = vunpack.c.l.b16 %v363
    %v461 = vunpack.c.l.b16 %v364
    %v462 = vunpack.c.l.b16 %v365
    %v463 = vunpack.c.l.b16 %v366
    %v464 = vunpack.c.l.b16 %v367
    %v465 = vunpack.c.l.b16 %v368
    %v466 = vunpack.c.l.b16 %v369
    %v467 = vunpack.c.l.b16 %v370
    %v468 = vunpack.c.l.b16 %v371
    %v469 = vunpack.c.l.b16 %v372
    %v470 = vunpack.c.l.b16 %v373
    %v471 = vunpack.c.l.b16 %v374
    %v472 = vunpack.c.l.b16 %v375
    %v473 = vunpack.c.l.b16 %v376
    %v474 = vunpack.c.l.b16 %v377
    %v475 = vunpack.c.l.b16 %v378
    %v476 = vunpack.c.l.b16 %v379
    %v477 = vunpack.c.l.b16 %v380
    %v478 = vunpack.c.l.b16 %v381
    %v479 = vunpack.c.l.b16 %v382
    %v480 = vunpack.c.l.b16 %v383
    %v481 = vunpack.c.l.b16 %v384
    %v482 = vunpack.c.l.b16 %v385
    %v483 = vunpack.c.l.b16 %v386
    %v484 = vunpack.c.l.b16 %v387
    %v485 = vunpack.c.l.b16 %v388
    %v486 = vunpack.c.l.b16 %v389
    %v487 = vunpack.c.l.b16 %v390
    %v488 = vunpack.c.l.b16 %v391
    %v489 = vunpack.c.l.b16 %v392
    %v490 = vunpack.c.l.b16 %v393
    %v491 = vunpack.c.l.b16 %v394
    %v492 = vunpack.c.l.b16 %v395
    %v493 = vunpack.c.l.b16 %v396
    %v494 = vunpack.c.l.b16 %v397
    %v495 = vunpack.c.l.b16 %v398
    %v496 = vunpack.c.l.b16 %v399
    %v497 = vunpack.c.l.b16 %v400
    %v498 = vunpack.c.l.b16 %v401
    %v499 = vunpack.c.l.b16 %v402
    %v500 = vunpack.c.l.b16 %v403
    %v501 = vunpack.c.l.b16 %v404
    %v502 = vunpack.c.l.b16 %v405
    %v503 = vunpack.c.l.b16 %v406
    %v504 = vunpack.c.l.b16 %v407
    %v505 = vunpack.c.l.b16 %v408
    %v506 = vunpack.c.l.b16 %v409
    %v507 = vunpack.c.l.b16 %v410
    %v508 = vpack.c.b16 %v461, %v460
    %v509 = vpack.c.b16 %v463, %v462
    %v510 = vpack.c.b16 %v465, %v464
    %v511 = vpack.c.b16 %v467, %v466
    %v512 = vpack.c.b16 %v469, %v468
    %v513 = vpack.c.b16 %v471, %v470
    %v514 = vpack.c.b16 %v473, %v472
    %v515 = vpack.c.b16 %v475, %v474
    %v516 = vpack.c.b16 %v477, %v476
    %v517 = vpack.c.b16 %v479, %v478
    %v518 = vpack.c.b16 %v481, %v480
    %v519 = vpack.c.b16 %v483, %v482
    %v520 = vpack.c.b16 %v485, %v484
    %v521 = vpack.c.b16 %v487, %v486
    %v522 = vpack.c.b16 %v489, %v488
    %v523 = vpack.c.b16 %v491, %v490
    %v524 = vpack.c.b16 %v493, %v492
    %v525 = vpack.c.b16 %v495, %v494
    %v526 = vpack.c.b16 %v497, %v496
    %v527 = vpack.c.b16 %v499, %v498
    %v528 = vpack.c.b16 %v501, %v500
    %v529 = vpack.c.b16 %v503, %v502
    %v530 = vpack.c.b16 %v505, %v504
    %v531 = vpack.c.b16 %v507, %v506
    %556 = vmatprep.subr.bf16.mxu0 0
    %557 = vmatpush1.bf16.msra.mxu0 %v508
    %558 = vmatprep.subr.bf16.mxu0 0
    %559 = vmatpush1.bf16.msra.mxu0 %v509
    %560 = vmatprep.subr.bf16.mxu0 0
    %561 = vmatpush1.bf16.msra.mxu0 %v510
    %562 = vmatprep.subr.bf16.mxu0 0
    %563 = vmatpush1.bf16.msra.mxu0 %v511
    %564 = vmatprep.subr.bf16.mxu0 0
    %565 = vmatpush1.bf16.msra.mxu0 %v512
    %566 = vmatprep.subr.bf16.mxu0 0
    %567 = vmatpush1.bf16.msra.mxu0 %v513
    %568 = vmatprep.subr.bf16.mxu0 0
    %569 = vmatpush1.bf16.msra.mxu0 %v514
    %570 = vmatprep.subr.bf16.mxu0 0
    %571 = vmatpush1.bf16.msra.mxu0 %v515
    %572 = vmatprep.subr.bf16.mxu0 0
    %573 = vmatpush1.bf16.msra.mxu0 %v516
    %574 = vmatprep.subr.bf16.mxu0 0
    %575 = vmatpush1.bf16.msra.mxu0 %v517
    %576 = vmatprep.subr.bf16.mxu0 0
    %577 = vmatpush1.bf16.msra.mxu0 %v518
    %578 = vmatprep.subr.bf16.mxu0 0
    %579 = vmatpush1.bf16.msra.mxu0 %v519
    %580 = vmatprep.subr.bf16.mxu0 0
    %581 = vmatpush1.bf16.msra.mxu0 %v520
    %582 = vmatprep.subr.bf16.mxu0 0
    %583 = vmatpush1.bf16.msra.mxu0 %v521
    %584 = vmatprep.subr.bf16.mxu0 0
    %585 = vmatpush1.bf16.msra.mxu0 %v522
    %586 = vmatprep.subr.bf16.mxu0 0
    %587 = vmatpush1.bf16.msra.mxu0 %v523
    %588 = vmatprep.mubr.bf16.mxu0 %v361
    %589 = vmatmul.mubr.bf16.gmra.mrb[0].mxu0 %v360
    %v590 = vpop.f32.mrb[0].mxu0
    %v591 = vadd.f32 %v411, %v590
    %v592 = vpop.f32.mrb[0].mxu0
    %v593 = vpop.f32.mrb[0].mxu0
    %v594 = vpop.f32.mrb[0].mxu0
    %595 = vdwg.mxu0
    %596 = vmatprep.subr.bf16.mxu0 0
    %597 = vmatpush1.bf16.msra.mxu0 %v524
    %598 = vmatprep.subr.bf16.mxu0 0
    %599 = vmatpush1.bf16.msra.mxu0 %v525
    %600 = vmatprep.subr.bf16.mxu0 0
    %601 = vmatpush1.bf16.msra.mxu0 %v526
    %602 = vmatprep.subr.bf16.mxu0 0
    %603 = vmatpush1.bf16.msra.mxu0 %v527
    %604 = vmatprep.subr.bf16.mxu0 0
    %605 = vmatpush1.bf16.msra.mxu0 %v528
    %606 = vmatprep.subr.bf16.mxu0 0
    %607 = vmatpush1.bf16.msra.mxu0 %v529
    %608 = vmatprep.subr.bf16.mxu0 0
    %609 = vmatpush1.bf16.msra.mxu0 %v530
    %610 = vmatprep.subr.bf16.mxu0 0
    %611 = vmatpush1.bf16.msra.mxu0 %v531
    %612 = vmatprep.subr.bf16.mxu0 0
    %613 = vmatpush1.bf16.msra.mxu0 0
    %614 = vmatprep.subr.bf16.mxu0 0
    %615 = vmatpush1.bf16.msra.mxu0 0
    %616 = vmatprep.subr.bf16.mxu0 0
    %617 = vmatpush1.bf16.msra.mxu0 0
    %618 = vmatprep.subr.bf16.mxu0 0
    %619 = vmatpush1.bf16.msra.mxu0 0
    %620 = vmatprep.subr.bf16.mxu0 0
    %621 = vmatpush1.bf16.msra.mxu0 0
    %622 = vmatprep.subr.bf16.mxu0 0
    %623 = vmatpush1.bf16.msra.mxu0 0
    %624 = vmatprep.subr.bf16.mxu0 0
    %625 = vmatpush1.bf16.msra.mxu0 0
    %626 = vmatprep.subr.bf16.mxu0 0
    %627 = vmatpush1.bf16.msra.mxu0 0
    %628 = vmatprep.mubr.bf16.mxu0 0
    %629 = vmatmul.mubr.bf16.gmra.mrb[0].mxu0 %v362
    %v630 = vpop.f32.mrb[0].mxu0
    %v631 = vadd.f32 %v591, %v630
    %v632 = vpop.f32.mrb[0].mxu0
    %v633 = vpop.f32.mrb[0].mxu0
    %v634 = vpop.f32.mrb[0].mxu0
    %635 = vdwg.mxu0
    %vm636 = vcmp.gt.f32.partialorder %v631, 0.0
    %v637 = vmin.f32 %v631, 0.0
    %v638 = vmul.f32 %v637, 1.442695
    %v639 = vpow.pop %v638
    %v640 = vsub.f32 %v639, 1.0
    %v641 = vsel %vm636, %v631, %v640
    %v642 = vld [vmem:[%s1] sm:$0xff]
    %v643 = vld [vmem:[%s1 + $0x8] sm:$0xff]
    %v644 = vld [vmem:[%s1 + $0x10] sm:$0xff]
    %v645 = vld [vmem:[%s1 + $0x18] sm:$0xff]
    %v646 = vpack.c.bf16 %v643, %v642
    %v647 = vpack.c.bf16 %v645, %v644
    %v648 = vld [vmem:[%s6] sm:$0xf]
    %v649 = vld [vmem:[%s6 + $0x4] sm:$0xf]
    %v650 = vld [vmem:[%s6 + $0x8] sm:$0xf]
    %v651 = vld [vmem:[%s6 + $0xc] sm:$0xf]
    %v652 = vld [vmem:[%s6 + $0x10] sm:$0xf]
    %v653 = vld [vmem:[%s6 + $0x14] sm:$0xf]
    %v654 = vld [vmem:[%s6 + $0x18] sm:$0xf]
    %v655 = vld [vmem:[%s6 + $0x1c] sm:$0xf]
    %v656 = vld [vmem:[%s6 + $0x20] sm:$0xf]
    %v657 = vld [vmem:[%s6 + $0x24] sm:$0xf]
    %v658 = vld [vmem:[%s6 + $0x28] sm:$0xf]
    %v659 = vld [vmem:[%s6 + $0x2c] sm:$0xf]
    %v660 = vld [vmem:[%s6 + $0x30] sm:$0xf]
    %v661 = vld [vmem:[%s6 + $0x34] sm:$0xf]
    %v662 = vld [vmem:[%s6 + $0x38] sm:$0xf]
    %v663 = vld [vmem:[%s6 + $0x3c] sm:$0xf]
    %v664 = vld [vmem:[%s7] sm:$0x1]
    %v665 = vlaneseq
    %v666 = vshrl.u32 %v665, 7
    %v667 = vsub.s32 0, %v666
    %v668 = vrot.slane %v664, %v667
    %v685 = vunpack.c.l.b16 %v648
    %v686 = vunpack.c.l.b16 %v649
    %v687 = vunpack.c.l.b16 %v650
    %v688 = vunpack.c.l.b16 %v651
    %v689 = vunpack.c.l.b16 %v652
    %v690 = vunpack.c.l.b16 %v653
    %v691 = vunpack.c.l.b16 %v654
    %v692 = vunpack.c.l.b16 %v655
    %v693 = vunpack.c.l.b16 %v656
    %v694 = vunpack.c.l.b16 %v657
    %v695 = vunpack.c.l.b16 %v658
    %v696 = vunpack.c.l.b16 %v659
    %v697 = vunpack.c.l.b16 %v660
    %v698 = vunpack.c.l.b16 %v661
    %v699 = vunpack.c.l.b16 %v662
    %v700 = vunpack.c.l.b16 %v663
    %v701 = vpack.c.b16 %v686, %v685
    %v702 = vpack.c.b16 %v688, %v687
    %v703 = vpack.c.b16 %v690, %v689
    %v704 = vpack.c.b16 %v692, %v691
    %v705 = vpack.c.b16 %v694, %v693
    %v706 = vpack.c.b16 %v696, %v695
    %v707 = vpack.c.b16 %v698, %v697
    %v708 = vpack.c.b16 %v700, %v699
    %717 = vmatprep.subr.bf16.mxu0 0
    %718 = vmatpush1.bf16.msra.mxu0 %v701
    %719 = vmatprep.subr.bf16.mxu0 0
    %720 = vmatpush1.bf16.msra.mxu0 %v702
    %721 = vmatprep.subr.bf16.mxu0 0
    %722 = vmatpush1.bf16.msra.mxu0 %v703
    %723 = vmatprep.subr.bf16.mxu0 0
    %724 = vmatpush1.bf16.msra.mxu0 %v704
    %725 = vmatprep.subr.bf16.mxu0 0
    %726 = vmatpush1.bf16.msra.mxu0 %v705
    %727 = vmatprep.subr.bf16.mxu0 0
    %728 = vmatpush1.bf16.msra.mxu0 %v706
    %729 = vmatprep.subr.bf16.mxu0 0
    %730 = vmatpush1.bf16.msra.mxu0 %v707
    %731 = vmatprep.subr.bf16.mxu0 0
    %732 = vmatpush1.bf16.msra.mxu0 %v708
    %733 = vmatprep.subr.bf16.mxu0 0
    %734 = vmatpush1.bf16.msra.mxu0 0
    %735 = vmatprep.subr.bf16.mxu0 0
    %736 = vmatpush1.bf16.msra.mxu0 0
    %737 = vmatprep.subr.bf16.mxu0 0
    %738 = vmatpush1.bf16.msra.mxu0 0
    %739 = vmatprep.subr.bf16.mxu0 0
    %740 = vmatpush1.bf16.msra.mxu0 0
    %741 = vmatprep.subr.bf16.mxu0 0
    %742 = vmatpush1.bf16.msra.mxu0 0
    %743 = vmatprep.subr.bf16.mxu0 0
    %744 = vmatpush1.bf16.msra.mxu0 0
    %745 = vmatprep.subr.bf16.mxu0 0
    %746 = vmatpush1.bf16.msra.mxu0 0
    %747 = vmatprep.subr.bf16.mxu0 0
    %748 = vmatpush1.bf16.msra.mxu0 0
    %749 = vmatprep.mubr.bf16.mxu0 0
    %750 = vmatmul.mubr.bf16.gmra.mrb[0].mxu0 %v646
    %v751 = vpop.f32.mrb[0].mxu0
    %v752 = vadd.f32 %v668, %v751
    %v753 = vpop.f32.mrb[0].mxu0
    %v754 = vpop.f32.mrb[0].mxu0
    %v755 = vadd.f32 %v668, %v754
    %v756 = vpop.f32.mrb[0].mxu0
    %757 = vmatprep.mubr.bf16.mxu0 0
    %758 = vmatmul.mubr.bf16.gmra.mrb[0].mxu0 %v647
    %v759 = vpop.f32.mrb[0].mxu0
    %v760 = vadd.f32 %v668, %v759
    %v761 = vpop.f32.mrb[0].mxu0
    %v762 = vpop.f32.mrb[0].mxu0
    %v763 = vadd.f32 %v668, %v762
    %v764 = vpop.f32.mrb[0].mxu0
    %765 = vdwg.mxu0
    %v766 = vld [vmem:[%s7 + $0x1] sm:$0x1]
    %v767 = vld [vmem:[%s7 + $0x2] sm:$0x1]
    %v768 = vsel %vm355, %v641, 0.0
    %769 = vadd.xlane.f32.xlu0 %v768
    %v770 = vpop.xlane.xlu0 %769
    %v771 = vsel %vm355, %v752, 0.0
    %772 = vadd.xlane.f32.xlu0 %v771
    %v773 = vpop.xlane.xlu0 %772
    %v774 = vsel %vm355, %v755, 0.0
    %775 = vadd.xlane.f32.xlu0 %v774
    %v776 = vpop.xlane.xlu0 %775
    %v777 = vsel %vm355, %v760, 0.0
    %778 = vadd.xlane.f32.xlu0 %v777
    %v779 = vpop.xlane.xlu0 %778
    %v780 = vsel %vm355, %v763, 0.0
    %781 = vadd.xlane.f32.xlu0 %v780
    %v782 = vpop.xlane.xlu0 %781
    %v783 = vrcp.pop 64.0
    %v784 = vmul.f32 %v770, %v783
    %v785 = vmul.f32 %v773, %v783
    %v786 = vmul.f32 %v776, %v783
    %v787 = vmul.f32 %v779, %v783
    %v788 = vmul.f32 %v782, %v783
    %v789 = vsub.f32 %v641, %v784
    %v790 = vsub.f32 %v752, %v785
    %v791 = vsub.f32 %v755, %v786
    %v792 = vsub.f32 %v760, %v787
    %v793 = vsub.f32 %v763, %v788
    %v794 = vmul.f32 %v789, %v789
    %v795 = vmul.f32 %v790, %v790
    %v796 = vmul.f32 %v791, %v791
    %v797 = vmul.f32 %v792, %v792
    %v798 = vmul.f32 %v793, %v793
    %v799 = vsel %vm355, %v794, 0.0
    %800 = vadd.xlane.f32.xlu0 %v799
    %v801 = vpop.xlane.xlu0 %800
    %v802 = vsel %vm355, %v795, 0.0
    %803 = vadd.xlane.f32.xlu0 %v802
    %v804 = vpop.xlane.xlu0 %803
    %v805 = vsel %vm355, %v796, 0.0
    %806 = vadd.xlane.f32.xlu0 %v805
    %v807 = vpop.xlane.xlu0 %806
    %v808 = vsel %vm355, %v797, 0.0
    %809 = vadd.xlane.f32.xlu0 %v808
    %v810 = vpop.xlane.xlu0 %809
    %v811 = vsel %vm355, %v798, 0.0
    %812 = vadd.xlane.f32.xlu0 %v811
    %v813 = vpop.xlane.xlu0 %812
    %v814 = vmul.f32 %v801, %v783
    %v815 = vmul.f32 %v804, %v783
    %v816 = vmul.f32 %v807, %v783
    %v817 = vmul.f32 %v810, %v783
    %v818 = vmul.f32 %v813, %v783
    %v819 = vadd.f32 %v814, 1e-05
    %v820 = vadd.f32 %v815, 1e-05
    %v821 = vadd.f32 %v816, 1e-05
    %v822 = vadd.f32 %v817, 1e-05
    %v823 = vadd.f32 %v818, 1e-05
    %v824 = vrsqrt.pop %v819
    %v825 = vrsqrt.pop %v820
    %v826 = vrsqrt.pop %v821
    %v827 = vrsqrt.pop %v822
    %v828 = vrsqrt.pop %v823
    %v829 = vmul.f32 %v789, %v824
    %v830 = vmul.f32 %v790, %v825
    %v831 = vmul.f32 %v791, %v826
    %v832 = vmul.f32 %v792, %v827
    %v833 = vmul.f32 %v793, %v828
    %v834 = vlaneseq
    %v835 = vshrl.u32 %v834, 7
    %v836 = vsub.s32 0, %v835
    %v837 = vrot.slane %v766, %v836
    %v838 = vmul.f32 %v829, %v837
    %v839 = vmul.f32 %v830, %v837
    %v840 = vmul.f32 %v831, %v837
    %v841 = vmul.f32 %v832, %v837
    %v842 = vmul.f32 %v833, %v837
    %v843 = vlaneseq
    %v844 = vshrl.u32 %v843, 7
    %v845 = vsub.s32 0, %v844
    %v846 = vrot.slane %v767, %v845
    %v847 = vadd.f32 %v838, %v846
    %v848 = vadd.f32 %v839, %v846
    %v849 = vadd.f32 %v840, %v846
    %v850 = vadd.f32 %v841, %v846
    %v851 = vadd.f32 %v842, %v846
    %v852 = vpack.c.bf16 %v848, %v847
    %v853 = vpack.c.bf16 %v850, %v849
    %v854 = vpack.c.bf16 %v851, %v851
    %v855 = vld [vmem:[%s8] sm:$0xf]
    %v856 = vld [vmem:[%s8 + $0x4] sm:$0xf]
    %v857 = vld [vmem:[%s8 + $0x8] sm:$0xf]
    %v858 = vld [vmem:[%s8 + $0xc] sm:$0xf]
    %v859 = vld [vmem:[%s8 + $0x10] sm:$0xf]
    %v860 = vld [vmem:[%s8 + $0x14] sm:$0xf]
    %v861 = vld [vmem:[%s8 + $0x18] sm:$0xf]
    %v862 = vld [vmem:[%s8 + $0x1c] sm:$0xf]
    %v871 = vunpack.c.l.b16 %v855
    %v872 = vunpack.c.l.b16 %v856
    %v873 = vunpack.c.l.b16 %v857
    %v874 = vunpack.c.l.b16 %v858
    %v875 = vunpack.c.l.b16 %v859
    %v876 = vunpack.c.l.b16 %v860
    %v877 = vunpack.c.l.b16 %v861
    %v878 = vunpack.c.l.b16 %v862
    %v879 = vpack.c.b16 %v872, %v871
    %v880 = vpack.c.b16 %v874, %v873
    %v881 = vpack.c.b16 %v876, %v875
    %v882 = vpack.c.b16 %v878, %v877
    %v888 = vsel %vm355, %v852, 0
    %v891 = vsel %vm355, %v853, 0
    %v894 = vsel %vm355, %v854, 0
    %896 = vmatprep.subr.bf16.mxu0 0
    %897 = vmatpush1.bf16.msra.mxu0 %v879
    %898 = vmatprep.subr.bf16.mxu0 0
    %899 = vmatpush1.bf16.msra.mxu0 %v880
    %900 = vmatprep.subr.bf16.mxu0 0
    %901 = vmatpush1.bf16.msra.mxu0 %v881
    %902 = vmatprep.subr.bf16.mxu0 0
    %903 = vmatpush1.bf16.msra.mxu0 %v882
    %904 = vmatprep.subr.bf16.mxu0 0
    %905 = vmatpush1.bf16.msra.mxu0 0
    %906 = vmatprep.subr.bf16.mxu0 0
    %907 = vmatpush1.bf16.msra.mxu0 0
    %908 = vmatprep.subr.bf16.mxu0 0
    %909 = vmatpush1.bf16.msra.mxu0 0
    %910 = vmatprep.subr.bf16.mxu0 0
    %911 = vmatpush1.bf16.msra.mxu0 0
    %912 = vmatprep.subr.bf16.mxu0 0
    %913 = vmatpush1.bf16.msra.mxu0 0
    %914 = vmatprep.subr.bf16.mxu0 0
    %915 = vmatpush1.bf16.msra.mxu0 0
    %916 = vmatprep.subr.bf16.mxu0 0
    %917 = vmatpush1.bf16.msra.mxu0 0
    %918 = vmatprep.subr.bf16.mxu0 0
    %919 = vmatpush1.bf16.msra.mxu0 0
    %920 = vmatprep.subr.bf16.mxu0 0
    %921 = vmatpush1.bf16.msra.mxu0 0
    %922 = vmatprep.subr.bf16.mxu0 0
    %923 = vmatpush1.bf16.msra.mxu0 0
    %924 = vmatprep.subr.bf16.mxu0 0
    %925 = vmatpush1.bf16.msra.mxu0 0
    %926 = vmatprep.subr.bf16.mxu0 0
    %927 = vmatpush1.bf16.msra.mxu0 0
    %928 = vmatprep.mubr.bf16.mxu0 0
    %929 = vmatmul.mubr.bf16.gmra.mrb[0].mxu0 %v888
    %v930 = vpop.f32.mrb[0].mxu0
    %v931 = vadd.f32 0.0, %v930
    %v932 = vpop.f32.mrb[0].mxu0
    %v933 = vpop.f32.mrb[0].mxu0
    %v934 = vadd.f32 0.0, %v933
    %v935 = vpop.f32.mrb[0].mxu0
    %936 = vmatprep.mubr.bf16.mxu0 0
    %937 = vmatmul.mubr.bf16.gmra.mrb[0].mxu0 %v891
    %v938 = vpop.f32.mrb[0].mxu0
    %v939 = vadd.f32 0.0, %v938
    %v940 = vpop.f32.mrb[0].mxu0
    %v941 = vpop.f32.mrb[0].mxu0
    %v942 = vadd.f32 0.0, %v941
    %v943 = vpop.f32.mrb[0].mxu0
    %944 = vmatprep.mubr.bf16.mxu0 0
    %945 = vmatmul.mubr.bf16.gmra.mrb[0].mxu0 %v894
    %v946 = vpop.f32.mrb[0].mxu0
    %v947 = vadd.f32 0.0, %v946
    %v948 = vpop.f32.mrb[0].mxu0
    %v949 = vpop.f32.mrb[0].mxu0
    %v950 = vpop.f32.mrb[0].mxu0
    %951 = vdwg.mxu0
    %v952 = vpack.c.bf16 %v934, %v931
    %v953 = vpack.c.bf16 %v942, %v939
    %v954 = vpack.c.bf16 %v947, %v947
    %v955 = vld [vmem:[%s11] sm:$0xff]
    %v956 = vld [vmem:[%s11 + $0x8] sm:$0xff]
    %v957 = vld [vmem:[%s11 + $0x10] sm:$0xff]
    %v958 = vld [vmem:[%s11 + $0x18] sm:$0xff]
    %v959 = vld [vmem:[%s11 + $0x20] sm:$0xff]
    %963 = vrot.lane.b32.xlu0 %v952, 96
    %v964 = vpop.permute.xlu0 %963
    %965 = vrot.lane.b32.xlu0 %v953, 96
    %v966 = vpop.permute.xlu0 %965
    %967 = vrot.lane.b32.xlu0 %v954, 96
    %v968 = vpop.permute.xlu0 %967
    %vm969 = vcmask 261120
    %v971 = vsel %vm969, %v952, 0
    %v974 = vsel %vm969, %v953, 0
    %v977 = vsel %vm969, %v954, 0
    %v980 = vsel %vm969, %v964, 0
    %v983 = vsel %vm969, %v966, 0
    %v986 = vsel %vm969, %v968, 0
    %988 = vmatprep.subr.bf16.mxu0 0
    %989 = vmatpush1.bf16.xpose.msra.mxu0 %v980
    %990 = vmatprep.subr.bf16.mxu0 0
    %991 = vmatpush1.bf16.xpose.msra.mxu0 %v983
    %992 = vmatprep.subr.bf16.mxu0 0
    %993 = vmatpush1.bf16.xpose.msra.mxu0 %v986
    %994 = vmatprep.subr.bf16.mxu0 0
    %995 = vmatpush1.bf16.xpose.msra.mxu0 0
    %996 = vmatprep.subr.bf16.mxu0 0
    %997 = vmatpush1.bf16.xpose.msra.mxu0 0
    %998 = vmatprep.subr.bf16.mxu0 0
    %999 = vmatpush1.bf16.xpose.msra.mxu0 0
    %1000 = vmatprep.subr.bf16.mxu0 0
    %1001 = vmatpush1.bf16.xpose.msra.mxu0 0
    %1002 = vmatprep.subr.bf16.mxu0 0
    %1003 = vmatpush1.bf16.xpose.msra.mxu0 0
    %1004 = vmatprep.subr.bf16.mxu0 0
    %1005 = vmatpush1.bf16.xpose.msra.mxu0 0
    %1006 = vmatprep.subr.bf16.mxu0 0
    %1007 = vmatpush1.bf16.xpose.msra.mxu0 0
    %1008 = vmatprep.subr.bf16.mxu0 0
    %1009 = vmatpush1.bf16.xpose.msra.mxu0 0
    %1010 = vmatprep.subr.bf16.mxu0 0
    %1011 = vmatpush1.bf16.xpose.msra.mxu0 0
    %1012 = vmatprep.subr.bf16.mxu0 0
    %1013 = vmatpush1.bf16.xpose.msra.mxu0 0
    %1014 = vmatprep.subr.bf16.mxu0 0
    %1015 = vmatpush1.bf16.xpose.msra.mxu0 0
    %1016 = vmatprep.subr.bf16.mxu0 0
    %1017 = vmatpush1.bf16.xpose.msra.mxu0 0
    %1018 = vmatprep.subr.bf16.mxu0 0
    %1019 = vmatpush1.bf16.xpose.msra.mxu0 0
    %1020 = vmatprep.mubr.bf16.mxu0 0
    %1021 = vmatmul.mubr.bf16.gmra.mrb[0].mxu0 %v971
    %v1022 = vpop.f32.mrb[0].mxu0
    %v1023 = vadd.f32 %v955, %v1022
    %v1024 = vpop.f32.mrb[0].mxu0
    %v1025 = vpop.f32.mrb[0].mxu0
    %v1026 = vadd.f32 %v956, %v1025
    %v1027 = vpop.f32.mrb[0].mxu0
    %1028 = vmatprep.mubr.bf16.mxu0 0
    %1029 = vmatmul.mubr.bf16.gmra.mrb[0].mxu0 %v974
    %v1030 = vpop.f32.mrb[0].mxu0
    %v1031 = vadd.f32 %v957, %v1030
    %v1032 = vpop.f32.mrb[0].mxu0
    %v1033 = vpop.f32.mrb[0].mxu0
    %v1034 = vadd.f32 %v958, %v1033
    %v1035 = vpop.f32.mrb[0].mxu0
    %1036 = vmatprep.mubr.bf16.mxu0 0
    %1037 = vmatmul.mubr.bf16.gmra.mrb[0].mxu0 %v977
    %v1038 = vpop.f32.mrb[0].mxu0
    %v1039 = vadd.f32 %v959, %v1038
    %v1040 = vpop.f32.mrb[0].mxu0
    %v1041 = vpop.f32.mrb[0].mxu0
    %v1042 = vpop.f32.mrb[0].mxu0
    %1043 = vdwg.mxu0
    %vm1044 = vcmask 326656
    %v1045 = vsel %vm1044, %v1023, -inf
    %1046 = vmax.xlane.f32.xlu0 %v1045
    %v1047 = vpop.xlane.xlu0 %1046
    %v1048 = vsel %vm1044, %v1026, -inf
    %1049 = vmax.xlane.f32.xlu0 %v1048
    %v1050 = vpop.xlane.xlu0 %1049
    %v1051 = vsel %vm1044, %v1031, -inf
    %1052 = vmax.xlane.f32.xlu0 %v1051
    %v1053 = vpop.xlane.xlu0 %1052
    %v1054 = vsel %vm1044, %v1034, -inf
    %1055 = vmax.xlane.f32.xlu0 %v1054
    %v1056 = vpop.xlane.xlu0 %1055
    %v1057 = vsel %vm1044, %v1039, -inf
    %1058 = vmax.xlane.f32.xlu0 %v1057
    %v1059 = vpop.xlane.xlu0 %1058
    %v1060 = vsub.f32 %v1023, %v1047
    %v1061 = vsub.f32 %v1026, %v1050
    %v1062 = vsub.f32 %v1031, %v1053
    %v1063 = vsub.f32 %v1034, %v1056
    %v1064 = vsub.f32 %v1039, %v1059
    %v1065 = vmul.f32 %v1060, 1.442695
    %v1066 = vpow.pop %v1065
    %v1067 = vmul.f32 %v1061, 1.442695
    %v1068 = vpow.pop %v1067
    %v1069 = vmul.f32 %v1062, 1.442695
    %v1070 = vpow.pop %v1069
    %v1071 = vmul.f32 %v1063, 1.442695
    %v1072 = vpow.pop %v1071
    %v1073 = vmul.f32 %v1064, 1.442695
    %v1074 = vpow.pop %v1073
    %v1075 = vsel %vm1044, %v1066, 0.0
    %1076 = vadd.xlane.f32.xlu0 %v1075
    %v1077 = vpop.xlane.xlu0 %1076
    %v1078 = vsel %vm1044, %v1068, 0.0
    %1079 = vadd.xlane.f32.xlu0 %v1078
    %v1080 = vpop.xlane.xlu0 %1079
    %v1081 = vsel %vm1044, %v1070, 0.0
    %1082 = vadd.xlane.f32.xlu0 %v1081
    %v1083 = vpop.xlane.xlu0 %1082
    %v1084 = vsel %vm1044, %v1072, 0.0
    %1085 = vadd.xlane.f32.xlu0 %v1084
    %v1086 = vpop.xlane.xlu0 %1085
    %v1087 = vsel %vm1044, %v1074, 0.0
    %1088 = vadd.xlane.f32.xlu0 %v1087
    %v1089 = vpop.xlane.xlu0 %1088
    %v1090 = vrcp.pop %v1077
    %v1091 = vrcp.pop %v1080
    %v1092 = vrcp.pop %v1083
    %v1093 = vrcp.pop %v1086
    %v1094 = vrcp.pop %v1089
    %v1095 = vmul.f32 %v1066, %v1090
    %v1096 = vmul.f32 %v1068, %v1091
    %v1097 = vmul.f32 %v1070, %v1092
    %v1098 = vmul.f32 %v1072, %v1093
    %v1099 = vmul.f32 %v1074, %v1094
    %v1100 = vpack.c.bf16 %v1096, %v1095
    %v1101 = vpack.c.bf16 %v1098, %v1097
    %v1102 = vpack.c.bf16 %v1099, %v1099
    %1103 = vrot.lane.b32.xlu0 %v952, 64
    %v1104 = vpop.permute.xlu0 %1103
    %1105 = vrot.lane.b32.xlu0 %v953, 64
    %v1106 = vpop.permute.xlu0 %1105
    %1107 = vrot.lane.b32.xlu0 %v954, 64
    %v1108 = vpop.permute.xlu0 %1107
    %v1112 = vsel %vm1044, %v1100, 0
    %v1115 = vsel %vm1044, %v1101, 0
    %v1118 = vsel %vm1044, %v1102, 0
    %vm1120 = vcmask 1043456
    %v1122 = vsel %vm1120, %v1108, 0
    %1124 = vmatprep.subr.bf16.mxu0 0
    %1125 = vmatpush1.bf16.msra.mxu0 %v1104
    %1126 = vmatprep.subr.bf16.mxu0 0
    %1127 = vmatpush1.bf16.msra.mxu0 %v1106
    %1128 = vmatprep.subr.bf16.mxu0 0
    %1129 = vmatpush1.bf16.msra.mxu0 %v1122
    %1130 = vmatprep.subr.bf16.mxu0 0
    %1131 = vmatpush1.bf16.msra.mxu0 0
    %1132 = vmatprep.subr.bf16.mxu0 0
    %1133 = vmatpush1.bf16.msra.mxu0 0
    %1134 = vmatprep.subr.bf16.mxu0 0
    %1135 = vmatpush1.bf16.msra.mxu0 0
    %1136 = vmatprep.subr.bf16.mxu0 0
    %1137 = vmatpush1.bf16.msra.mxu0 0
    %1138 = vmatprep.subr.bf16.mxu0 0
    %1139 = vmatpush1.bf16.msra.mxu0 0
    %1140 = vmatprep.subr.bf16.mxu0 0
    %1141 = vmatpush1.bf16.msra.mxu0 0
    %1142 = vmatprep.subr.bf16.mxu0 0
    %1143 = vmatpush1.bf16.msra.mxu0 0
    %1144 = vmatprep.subr.bf16.mxu0 0
    %1145 = vmatpush1.bf16.msra.mxu0 0
    %1146 = vmatprep.subr.bf16.mxu0 0
    %1147 = vmatpush1.bf16.msra.mxu0 0
    %1148 = vmatprep.subr.bf16.mxu0 0
    %1149 = vmatpush1.bf16.msra.mxu0 0
    %1150 = vmatprep.subr.bf16.mxu0 0
    %1151 = vmatpush1.bf16.msra.mxu0 0
    %1152 = vmatprep.subr.bf16.mxu0 0
    %1153 = vmatpush1.bf16.msra.mxu0 0
    %1154 = vmatprep.subr.bf16.mxu0 0
    %1155 = vmatpush1.bf16.msra.mxu0 0
    %1156 = vmatprep.mubr.bf16.mxu0 0
    %1157 = vmatmul.mubr.bf16.gmra.mrb[0].mxu0 %v1112
    %v1158 = vpop.f32.mrb[0].mxu0
    %v1159 = vadd.f32 0.0, %v1158
    %v1160 = vpop.f32.mrb[0].mxu0
    %v1161 = vpop.f32.mrb[0].mxu0
    %v1162 = vadd.f32 0.0, %v1161
    %v1163 = vpop.f32.mrb[0].mxu0
    %1164 = vmatprep.mubr.bf16.mxu0 0
    %1165 = vmatmul.mubr.bf16.gmra.mrb[0].mxu0 %v1115
    %v1166 = vpop.f32.mrb[0].mxu0
    %v1167 = vadd.f32 0.0, %v1166
    %v1168 = vpop.f32.mrb[0].mxu0
    %v1169 = vpop.f32.mrb[0].mxu0
    %v1170 = vadd.f32 0.0, %v1169
    %v1171 = vpop.f32.mrb[0].mxu0
    %1172 = vmatprep.mubr.bf16.mxu0 0
    %1173 = vmatmul.mubr.bf16.gmra.mrb[0].mxu0 %v1118
    %v1174 = vpop.f32.mrb[0].mxu0
    %v1175 = vadd.f32 0.0, %v1174
    %v1176 = vpop.f32.mrb[0].mxu0
    %v1177 = vpop.f32.mrb[0].mxu0
    %v1178 = vpop.f32.mrb[0].mxu0
    %1179 = vdwg.mxu0
    %v1180 = vld [vmem:[%s10] sm:$0x1]
    %v1181 = vld [vmem:[%s10 + $0x1] sm:$0x1]
    %v1182 = vsel %vm969, %v1159, 0.0
    %1183 = vadd.xlane.f32.xlu0 %v1182
    %v1184 = vpop.xlane.xlu0 %1183
    %v1185 = vsel %vm969, %v1162, 0.0
    %1186 = vadd.xlane.f32.xlu0 %v1185
    %v1187 = vpop.xlane.xlu0 %1186
    %v1188 = vsel %vm969, %v1167, 0.0
    %1189 = vadd.xlane.f32.xlu0 %v1188
    %v1190 = vpop.xlane.xlu0 %1189
    %v1191 = vsel %vm969, %v1170, 0.0
    %1192 = vadd.xlane.f32.xlu0 %v1191
    %v1193 = vpop.xlane.xlu0 %1192
    %v1194 = vsel %vm969, %v1175, 0.0
    %1195 = vadd.xlane.f32.xlu0 %v1194
    %v1196 = vpop.xlane.xlu0 %1195
    %v1197 = vrcp.pop 32.0
    %v1198 = vmul.f32 %v1184, %v1197
    %v1199 = vmul.f32 %v1187, %v1197
    %v1200 = vmul.f32 %v1190, %v1197
    %v1201 = vmul.f32 %v1193, %v1197
    %v1202 = vmul.f32 %v1196, %v1197
    %v1203 = vsub.f32 %v1159, %v1198
    %v1204 = vsub.f32 %v1162, %v1199
    %v1205 = vsub.f32 %v1167, %v1200
    %v1206 = vsub.f32 %v1170, %v1201
    %v1207 = vsub.f32 %v1175, %v1202
    %v1208 = vmul.f32 %v1203, %v1203
    %v1209 = vmul.f32 %v1204, %v1204
    %v1210 = vmul.f32 %v1205, %v1205
    %v1211 = vmul.f32 %v1206, %v1206
    %v1212 = vmul.f32 %v1207, %v1207
    %v1213 = vsel %vm969, %v1208, 0.0
    %1214 = vadd.xlane.f32.xlu0 %v1213
    %v1215 = vpop.xlane.xlu0 %1214
    %v1216 = vsel %vm969, %v1209, 0.0
    %1217 = vadd.xlane.f32.xlu0 %v1216
    %v1218 = vpop.xlane.xlu0 %1217
    %v1219 = vsel %vm969, %v1210, 0.0
    %1220 = vadd.xlane.f32.xlu0 %v1219
    %v1221 = vpop.xlane.xlu0 %1220
    %v1222 = vsel %vm969, %v1211, 0.0
    %1223 = vadd.xlane.f32.xlu0 %v1222
    %v1224 = vpop.xlane.xlu0 %1223
    %v1225 = vsel %vm969, %v1212, 0.0
    %1226 = vadd.xlane.f32.xlu0 %v1225
    %v1227 = vpop.xlane.xlu0 %1226
    %v1228 = vmul.f32 %v1215, %v1197
    %v1229 = vmul.f32 %v1218, %v1197
    %v1230 = vmul.f32 %v1221, %v1197
    %v1231 = vmul.f32 %v1224, %v1197
    %v1232 = vmul.f32 %v1227, %v1197
    %v1233 = vadd.f32 %v1228, 1e-05
    %v1234 = vadd.f32 %v1229, 1e-05
    %v1235 = vadd.f32 %v1230, 1e-05
    %v1236 = vadd.f32 %v1231, 1e-05
    %v1237 = vadd.f32 %v1232, 1e-05
    %v1238 = vrsqrt.pop %v1233
    %v1239 = vrsqrt.pop %v1234
    %v1240 = vrsqrt.pop %v1235
    %v1241 = vrsqrt.pop %v1236
    %v1242 = vrsqrt.pop %v1237
    %v1243 = vmul.f32 %v1203, %v1238
    %v1244 = vmul.f32 %v1204, %v1239
    %v1245 = vmul.f32 %v1205, %v1240
    %v1246 = vmul.f32 %v1206, %v1241
    %v1247 = vmul.f32 %v1207, %v1242
    %v1248 = vlaneseq
    %v1249 = vshrl.u32 %v1248, 7
    %v1250 = vsub.s32 0, %v1249
    %v1251 = vrot.slane %v1180, %v1250
    %v1252 = vmul.f32 %v1243, %v1251
    %v1253 = vmul.f32 %v1244, %v1251
    %v1254 = vmul.f32 %v1245, %v1251
    %v1255 = vmul.f32 %v1246, %v1251
    %v1256 = vmul.f32 %v1247, %v1251
    %v1257 = vlaneseq
    %v1258 = vshrl.u32 %v1257, 7
    %v1259 = vsub.s32 0, %v1258
    %v1260 = vrot.slane %v1181, %v1259
    %v1261 = vadd.f32 %v1252, %v1260
    %v1262 = vadd.f32 %v1253, %v1260
    %v1263 = vadd.f32 %v1254, %v1260
    %v1264 = vadd.f32 %v1255, %v1260
    %v1265 = vadd.f32 %v1256, %v1260
    %v1266 = vpack.c.bf16 %v1262, %v1261
    %v1267 = vpack.c.bf16 %v1264, %v1263
    %v1268 = vpack.c.bf16 %v1265, %v1265
    %v1269 = vld [vmem:[%s9] sm:$0xf]
    %v1270 = vld [vmem:[%s9 + $0x4] sm:$0xf]
    %v1271 = vld [vmem:[%s9 + $0x8] sm:$0xf]
    %v1272 = vld [vmem:[%s9 + $0xc] sm:$0xf]
    %v1273 = vld [vmem:[%s10 + $0x2] sm:$0x1]
    %v1274 = vlaneseq
    %v1275 = vshrl.u32 %v1274, 7
    %v1276 = vsub.s32 0, %v1275
    %v1277 = vrot.slane %v1273, %v1276
    %v1282 = vunpack.c.l.b16 %v1269
    %v1283 = vunpack.c.l.b16 %v1270
    %v1284 = vunpack.c.l.b16 %v1271
    %v1285 = vunpack.c.l.b16 %v1272
    %v1286 = vpack.c.b16 %v1283, %v1282
    %v1287 = vpack.c.b16 %v1285, %v1284
    %v1291 = vsel %vm969, %v1266, 0
    %v1294 = vsel %vm969, %v1267, 0
    %v1297 = vsel %vm969, %v1268, 0
    %1299 = vmatprep.subr.bf16.mxu0 0
    %1300 = vmatpush1.bf16.msra.mxu0 %v1286
    %1301 = vmatprep.subr.bf16.mxu0 0
    %1302 = vmatpush1.bf16.msra.mxu0 %v1287
    %1303 = vmatprep.subr.bf16.mxu0 0
    %1304 = vmatpush1.bf16.msra.mxu0 0
    %1305 = vmatprep.subr.bf16.mxu0 0
    %1306 = vmatpush1.bf16.msra.mxu0 0
    %1307 = vmatprep.subr.bf16.mxu0 0
    %1308 = vmatpush1.bf16.msra.mxu0 0
    %1309 = vmatprep.subr.bf16.mxu0 0
    %1310 = vmatpush1.bf16.msra.mxu0 0
    %1311 = vmatprep.subr.bf16.mxu0 0
    %1312 = vmatpush1.bf16.msra.mxu0 0
    %1313 = vmatprep.subr.bf16.mxu0 0
    %1314 = vmatpush1.bf16.msra.mxu0 0
    %1315 = vmatprep.subr.bf16.mxu0 0
    %1316 = vmatpush1.bf16.msra.mxu0 0
    %1317 = vmatprep.subr.bf16.mxu0 0
    %1318 = vmatpush1.bf16.msra.mxu0 0
    %1319 = vmatprep.subr.bf16.mxu0 0
    %1320 = vmatpush1.bf16.msra.mxu0 0
    %1321 = vmatprep.subr.bf16.mxu0 0
    %1322 = vmatpush1.bf16.msra.mxu0 0
    %1323 = vmatprep.subr.bf16.mxu0 0
    %1324 = vmatpush1.bf16.msra.mxu0 0
    %1325 = vmatprep.subr.bf16.mxu0 0
    %1326 = vmatpush1.bf16.msra.mxu0 0
    %1327 = vmatprep.subr.bf16.mxu0 0
    %1328 = vmatpush1.bf16.msra.mxu0 0
    %1329 = vmatprep.subr.bf16.mxu0 0
    %1330 = vmatpush1.bf16.msra.mxu0 0
    %1331 = vmatprep.mubr.bf16.mxu0 0
    %1332 = vmatmul.mubr.bf16.gmra.mrb[0].mxu0 %v1291
    %v1333 = vpop.f32.mrb[0].mxu0
    %v1334 = vadd.f32 %v1277, %v1333
    %v1335 = vpop.f32.mrb[0].mxu0
    %v1336 = vpop.f32.mrb[0].mxu0
    %v1337 = vadd.f32 %v1277, %v1336
    %v1338 = vpop.f32.mrb[0].mxu0
    %1339 = vmatprep.mubr.bf16.mxu0 0
    %1340 = vmatmul.mubr.bf16.gmra.mrb[0].mxu0 %v1294
    %v1341 = vpop.f32.mrb[0].mxu0
    %v1342 = vadd.f32 %v1277, %v1341
    %v1343 = vpop.f32.mrb[0].mxu0
    %v1344 = vpop.f32.mrb[0].mxu0
    %v1345 = vadd.f32 %v1277, %v1344
    %v1346 = vpop.f32.mrb[0].mxu0
    %1347 = vmatprep.mubr.bf16.mxu0 0
    %1348 = vmatmul.mubr.bf16.gmra.mrb[0].mxu0 %v1297
    %v1349 = vpop.f32.mrb[0].mxu0
    %v1350 = vadd.f32 %v1277, %v1349
    %v1351 = vpop.f32.mrb[0].mxu0
    %v1352 = vpop.f32.mrb[0].mxu0
    %v1353 = vpop.f32.mrb[0].mxu0
    %1354 = vdwg.mxu0
    %v1355 = vmul.f32 %v1334, 0.5
    %v1356 = vmul.f32 %v1337, 0.5
    %v1357 = vmul.f32 %v1342, 0.5
    %v1358 = vmul.f32 %v1345, 0.5
    %v1359 = vmul.f32 %v1350, 0.5
    %v1360 = vmul.f32 %v1334, 0.044715
    %v1361 = vmul.f32 %v1337, 0.044715
    %v1362 = vmul.f32 %v1342, 0.044715
    %v1363 = vmul.f32 %v1345, 0.044715
    %v1364 = vmul.f32 %v1350, 0.044715
    %v1365 = vmul.f32 %v1360, %v1334
    %v1366 = vmul.f32 %v1361, %v1337
    %v1367 = vmul.f32 %v1362, %v1342
    %v1368 = vmul.f32 %v1363, %v1345
    %v1369 = vmul.f32 %v1364, %v1350
    %v1370 = vmul.f32 %v1365, %v1334
    %v1371 = vmul.f32 %v1366, %v1337
    %v1372 = vmul.f32 %v1367, %v1342
    %v1373 = vmul.f32 %v1368, %v1345
    %v1374 = vmul.f32 %v1369, %v1350
    %v1375 = vadd.f32 %v1334, %v1370
    %v1376 = vadd.f32 %v1337, %v1371
    %v1377 = vadd.f32 %v1342, %v1372
    %v1378 = vadd.f32 %v1345, %v1373
    %v1379 = vadd.f32 %v1350, %v1374
    %v1380 = vmul.f32 %v1375, 0.7978846
    %v1381 = vmul.f32 %v1376, 0.7978846
    %v1382 = vmul.f32 %v1377, 0.7978846
    %v1383 = vmul.f32 %v1378, 0.7978846
    %v1384 = vmul.f32 %v1379, 0.7978846
    %v1385 = vtanh.pop %v1380
    %v1386 = vtanh.pop %v1381
    %v1387 = vtanh.pop %v1382
    %v1388 = vtanh.pop %v1383
    %v1389 = vtanh.pop %v1384
    %v1390 = vadd.f32 %v1385, 1.0
    %v1391 = vadd.f32 %v1386, 1.0
    %v1392 = vadd.f32 %v1387, 1.0
    %v1393 = vadd.f32 %v1388, 1.0
    %v1394 = vadd.f32 %v1389, 1.0
    %v1395 = vmul.f32 %v1355, %v1390
    %v1396 = vmul.f32 %v1356, %v1391
    %v1397 = vmul.f32 %v1357, %v1392
    %v1398 = vmul.f32 %v1358, %v1393
    %v1399 = vmul.f32 %v1359, %v1394
    %v1400 = vpack.c.bf16 %v1396, %v1395
    %v1401 = vpack.c.bf16 %v1398, %v1397
    %v1402 = vpack.c.bf16 %v1399, %v1399
    %s1403 = scalar_lea.vmem %s9, 16
    %v1404 = vld [vmem:[%s1403] sm:$0xf]
    %v1405 = vld [vmem:[%s1403 + $0x4] sm:$0xf]
    %v1406 = vld [vmem:[%s1403 + $0x8] sm:$0xf]
    %v1407 = vld [vmem:[%s1403 + $0xc] sm:$0xf]
    %v1408 = vld [vmem:[%s10 + $0x3] sm:$0x1]
    %v1409 = vlaneseq
    %v1410 = vshrl.u32 %v1409, 7
    %v1411 = vsub.s32 0, %v1410
    %v1412 = vrot.slane %v1408, %v1411
    %v1417 = vunpack.c.l.b16 %v1404
    %v1418 = vunpack.c.l.b16 %v1405
    %v1419 = vunpack.c.l.b16 %v1406
    %v1420 = vunpack.c.l.b16 %v1407
    %v1421 = vpack.c.b16 %v1418, %v1417
    %v1422 = vpack.c.b16 %v1420, %v1419
    %v1426 = vsel %vm969, %v1400, 0
    %v1429 = vsel %vm969, %v1401, 0
    %v1432 = vsel %vm969, %v1402, 0
    %1434 = vmatprep.subr.bf16.mxu0 0
    %1435 = vmatpush1.bf16.msra.mxu0 %v1421
    %1436 = vmatprep.subr.bf16.mxu0 0
    %1437 = vmatpush1.bf16.msra.mxu0 %v1422
    %1438 = vmatprep.subr.bf16.mxu0 0
    %1439 = vmatpush1.bf16.msra.mxu0 0
    %1440 = vmatprep.subr.bf16.mxu0 0
    %1441 = vmatpush1.bf16.msra.mxu0 0
    %1442 = vmatprep.subr.bf16.mxu0 0
    %1443 = vmatpush1.bf16.msra.mxu0 0
    %1444 = vmatprep.subr.bf16.mxu0 0
    %1445 = vmatpush1.bf16.msra.mxu0 0
    %1446 = vmatprep.subr.bf16.mxu0 0
    %1447 = vmatpush1.bf16.msra.mxu0 0
    %1448 = vmatprep.subr.bf16.mxu0 0
    %1449 = vmatpush1.bf16.msra.mxu0 0
    %1450 = vmatprep.subr.bf16.mxu0 0
    %1451 = vmatpush1.bf16.msra.mxu0 0
    %1452 = vmatprep.subr.bf16.mxu0 0
    %1453 = vmatpush1.bf16.msra.mxu0 0
    %1454 = vmatprep.subr.bf16.mxu0 0
    %1455 = vmatpush1.bf16.msra.mxu0 0
    %1456 = vmatprep.subr.bf16.mxu0 0
    %1457 = vmatpush1.bf16.msra.mxu0 0
    %1458 = vmatprep.subr.bf16.mxu0 0
    %1459 = vmatpush1.bf16.msra.mxu0 0
    %1460 = vmatprep.subr.bf16.mxu0 0
    %1461 = vmatpush1.bf16.msra.mxu0 0
    %1462 = vmatprep.subr.bf16.mxu0 0
    %1463 = vmatpush1.bf16.msra.mxu0 0
    %1464 = vmatprep.subr.bf16.mxu0 0
    %1465 = vmatpush1.bf16.msra.mxu0 0
    %1466 = vmatprep.mubr.bf16.mxu0 0
    %1467 = vmatmul.mubr.bf16.gmra.mrb[0].mxu0 %v1426
    %v1468 = vpop.f32.mrb[0].mxu0
    %v1469 = vadd.f32 %v1412, %v1468
    %v1470 = vpop.f32.mrb[0].mxu0
    %v1471 = vpop.f32.mrb[0].mxu0
    %v1472 = vadd.f32 %v1412, %v1471
    %v1473 = vpop.f32.mrb[0].mxu0
    %1474 = vmatprep.mubr.bf16.mxu0 0
    %1475 = vmatmul.mubr.bf16.gmra.mrb[0].mxu0 %v1429
    %v1476 = vpop.f32.mrb[0].mxu0
    %v1477 = vadd.f32 %v1412, %v1476
    %v1478 = vpop.f32.mrb[0].mxu0
    %v1479 = vpop.f32.mrb[0].mxu0
    %v1480 = vadd.f32 %v1412, %v1479
    %v1481 = vpop.f32.mrb[0].mxu0
    %1482 = vmatprep.mubr.bf16.mxu0 0
    %1483 = vmatmul.mubr.bf16.gmra.mrb[0].mxu0 %v1432
    %v1484 = vpop.f32.mrb[0].mxu0
    %v1485 = vadd.f32 %v1412, %v1484
    %v1486 = vpop.f32.mrb[0].mxu0
    %v1487 = vpop.f32.mrb[0].mxu0
    %v1488 = vpop.f32.mrb[0].mxu0
    %1489 = vdwg.mxu0
    %v1490 = vld [vmem:[%s10 + $0x4] sm:$0x1]
    %v1491 = vld [vmem:[%s10 + $0x5] sm:$0x1]
    %v1492 = vsel %vm969, %v1469, 0.0
    %1493 = vadd.xlane.f32.xlu0 %v1492
    %v1494 = vpop.xlane.xlu0 %1493
    %v1495 = vsel %vm969, %v1472, 0.0
    %1496 = vadd.xlane.f32.xlu0 %v1495
    %v1497 = vpop.xlane.xlu0 %1496
    %v1498 = vsel %vm969, %v1477, 0.0
    %1499 = vadd.xlane.f32.xlu0 %v1498
    %v1500 = vpop.xlane.xlu0 %1499
    %v1501 = vsel %vm969, %v1480, 0.0
    %1502 = vadd.xlane.f32.xlu0 %v1501
    %v1503 = vpop.xlane.xlu0 %1502
    %v1504 = vsel %vm969, %v1485, 0.0
    %1505 = vadd.xlane.f32.xlu0 %v1504
    %v1506 = vpop.xlane.xlu0 %1505
    %v1507 = vmul.f32 %v1494, %v1197
    %v1508 = vmul.f32 %v1497, %v1197
    %v1509 = vmul.f32 %v1500, %v1197
    %v1510 = vmul.f32 %v1503, %v1197
    %v1511 = vmul.f32 %v1506, %v1197
    %v1512 = vsub.f32 %v1469, %v1507
    %v1513 = vsub.f32 %v1472, %v1508
    %v1514 = vsub.f32 %v1477, %v1509
    %v1515 = vsub.f32 %v1480, %v1510
    %v1516 = vsub.f32 %v1485, %v1511
    %v1517 = vmul.f32 %v1512, %v1512
    %v1518 = vmul.f32 %v1513, %v1513
    %v1519 = vmul.f32 %v1514, %v1514
    %v1520 = vmul.f32 %v1515, %v1515
    %v1521 = vmul.f32 %v1516, %v1516
    %v1522 = vsel %vm969, %v1517, 0.0
    %1523 = vadd.xlane.f32.xlu0 %v1522
    %v1524 = vpop.xlane.xlu0 %1523
    %v1525 = vsel %vm969, %v1518, 0.0
    %1526 = vadd.xlane.f32.xlu0 %v1525
    %v1527 = vpop.xlane.xlu0 %1526
    %v1528 = vsel %vm969, %v1519, 0.0
    %1529 = vadd.xlane.f32.xlu0 %v1528
    %v1530 = vpop.xlane.xlu0 %1529
    %v1531 = vsel %vm969, %v1520, 0.0
    %1532 = vadd.xlane.f32.xlu0 %v1531
    %v1533 = vpop.xlane.xlu0 %1532
    %v1534 = vsel %vm969, %v1521, 0.0
    %1535 = vadd.xlane.f32.xlu0 %v1534
    %v1536 = vpop.xlane.xlu0 %1535
    %v1537 = vmul.f32 %v1524, %v1197
    %v1538 = vmul.f32 %v1527, %v1197
    %v1539 = vmul.f32 %v1530, %v1197
    %v1540 = vmul.f32 %v1533, %v1197
    %v1541 = vmul.f32 %v1536, %v1197
    %v1542 = vadd.f32 %v1537, 1e-05
    %v1543 = vadd.f32 %v1538, 1e-05
    %v1544 = vadd.f32 %v1539, 1e-05
    %v1545 = vadd.f32 %v1540, 1e-05
    %v1546 = vadd.f32 %v1541, 1e-05
    %v1547 = vrsqrt.pop %v1542
    %v1548 = vrsqrt.pop %v1543
    %v1549 = vrsqrt.pop %v1544
    %v1550 = vrsqrt.pop %v1545
    %v1551 = vrsqrt.pop %v1546
    %v1552 = vmul.f32 %v1512, %v1547
    %v1553 = vmul.f32 %v1513, %v1548
    %v1554 = vmul.f32 %v1514, %v1549
    %v1555 = vmul.f32 %v1515, %v1550
    %v1556 = vmul.f32 %v1516, %v1551
    %v1557 = vlaneseq
    %v1558 = vshrl.u32 %v1557, 7
    %v1559 = vsub.s32 0, %v1558
    %v1560 = vrot.slane %v1490, %v1559
    %v1561 = vmul.f32 %v1552, %v1560
    %v1562 = vmul.f32 %v1553, %v1560
    %v1563 = vmul.f32 %v1554, %v1560
    %v1564 = vmul.f32 %v1555, %v1560
    %v1565 = vmul.f32 %v1556, %v1560
    %v1566 = vlaneseq
    %v1567 = vshrl.u32 %v1566, 7
    %v1568 = vsub.s32 0, %v1567
    %v1569 = vrot.slane %v1491, %v1568
    %v1570 = vadd.f32 %v1561, %v1569
    %v1571 = vadd.f32 %v1562, %v1569
    %v1572 = vadd.f32 %v1563, %v1569
    %v1573 = vadd.f32 %v1564, %v1569
    %v1574 = vadd.f32 %v1565, %v1569
    %v1575 = vadd.s32 %v335, 8
    %v1576 = vadd.s32 %v335, 16
    %v1577 = vadd.s32 %v335, 24
    %v1578 = vadd.s32 %v335, 32
    %vm1579 = vcmp.lt.s32.totalorder %v335, 6
    %vm1580 = vcmp.lt.s32.totalorder %v1575, 6
    %vm1581 = vcmp.lt.s32.totalorder %v1576, 6
    %vm1582 = vcmp.lt.s32.totalorder %v1577, 6
    %vm1583 = vcmp.lt.s32.totalorder %v1578, 6
    %v1584 = vsel %vm1579, 1, 0
    %v1585 = vsel %vm1580, 1, 0
    %v1586 = vsel %vm1581, 1, 0
    %v1587 = vsel %vm1582, 1, 0
    %v1588 = vsel %vm1583, 1, 0
    %v1589 = vcvt.s32.f32 %v1584
    %v1590 = vcvt.s32.f32 %v1585
    %v1591 = vcvt.s32.f32 %v1586
    %v1592 = vcvt.s32.f32 %v1587
    %v1593 = vcvt.s32.f32 %v1588
    %vm1594 = vcmp.ge.s32.totalorder %v335, 8
    %vm1595 = vcmp.ge.s32.totalorder %v1575, 8
    %vm1596 = vcmp.ge.s32.totalorder %v1576, 8
    %vm1597 = vcmp.ge.s32.totalorder %v1577, 8
    %vm1598 = vcmp.ge.s32.totalorder %v1578, 8
    %vm1599 = vcmp.lt.s32.totalorder %v335, 40
    %vm1600 = vcmp.lt.s32.totalorder %v1575, 40
    %vm1601 = vcmp.lt.s32.totalorder %v1576, 40
    %vm1602 = vcmp.lt.s32.totalorder %v1577, 40
    %vm1603 = vcmp.lt.s32.totalorder %v1578, 40
    %vm1604 = vmand %vm1594, %vm1599
    %vm1605 = vmand %vm1595, %vm1600
    %vm1606 = vmand %vm1596, %vm1601
    %vm1607 = vmand %vm1597, %vm1602
    %vm1608 = vmand %vm1598, %vm1603
    %v1609 = vsel %vm1604, 1, 0
    %v1610 = vsel %vm1605, 1, 0
    %v1611 = vsel %vm1606, 1, 0
    %v1612 = vsel %vm1607, 1, 0
    %v1613 = vsel %vm1608, 1, 0
    %v1614 = vcvt.s32.f32 %v1609
    %v1615 = vcvt.s32.f32 %v1610
    %v1616 = vcvt.s32.f32 %v1611
    %v1617 = vcvt.s32.f32 %v1612
    %v1618 = vcvt.s32.f32 %v1613
    %v1619 = vmul.f32 %v1570, %v1589
    %v1620 = vmul.f32 %v1571, %v1590
    %v1621 = vmul.f32 %v1572, %v1591
    %v1622 = vmul.f32 %v1573, %v1592
    %v1623 = vmul.f32 %v1574, %v1593
    %v1624 = vsel %vm969, %v1619, 0.0
    %v1625 = vsel %vm969, %v1620, 0.0
    %v1626 = vadd.f32 %v1624, %v1625
    %v1627 = vsel %vm969, %v1621, 0.0
    %v1628 = vadd.f32 %v1626, %v1627
    %v1629 = vsel %vm969, %v1622, 0.0
    %v1630 = vadd.f32 %v1628, %v1629
    %v1631 = vsel %vm969, %v1623, 0.0
    %v1632 = vadd.f32 %v1630, %v1631
    %v1633 = vrot.slane %v1632, 4
    %v1634 = vadd.f32 %v1632, %v1633
    %v1635 = vrot.slane %v1634, 2
    %v1636 = vadd.f32 %v1634, %v1635
    %v1637 = vrot.slane %v1636, 1
    %v1638 = vadd.f32 %v1636, %v1637
    %v1639 = vmul.f32 %v1638, 0.16666667
    %v1640 = vmul.f32 %v1570, %v1614
    %v1641 = vmul.f32 %v1571, %v1615
    %v1642 = vmul.f32 %v1572, %v1616
    %v1643 = vmul.f32 %v1573, %v1617
    %v1644 = vmul.f32 %v1574, %v1618
    %v1645 = vsel %vm969, %v1640, 0.0
    %v1646 = vsel %vm969, %v1641, 0.0
    %v1647 = vadd.f32 %v1645, %v1646
    %v1648 = vsel %vm969, %v1642, 0.0
    %v1649 = vadd.f32 %v1647, %v1648
    %v1650 = vsel %vm969, %v1643, 0.0
    %v1651 = vadd.f32 %v1649, %v1650
    %v1652 = vsel %vm969, %v1644, 0.0
    %v1653 = vadd.f32 %v1651, %v1652
    %v1654 = vrot.slane %v1653, 4
    %v1655 = vadd.f32 %v1653, %v1654
    %v1656 = vrot.slane %v1655, 2
    %v1657 = vadd.f32 %v1655, %v1656
    %v1658 = vrot.slane %v1657, 1
    %v1659 = vadd.f32 %v1657, %v1658
    %v1660 = vmul.f32 %v1659, 0.03125
    %1662 = vrot.lane.b32.xlu0 %v1660, 32
    %v1663 = vpop.permute.xlu0 %1662
    %v1665 = vsel %vm969, %v1639, %v1663
    %v1666 = vld [vmem:[%s12] sm:$0xff]
    %v1667 = vld [vmem:[%s12 + $0x8] sm:$0xff]
    %v1668 = vld [vmem:[%s12 + $0x10] sm:$0xff]
    %v1669 = vld [vmem:[%s12 + $0x18] sm:$0xff]
    %v1670 = vld [vmem:[%s12 + $0x20] sm:$0xff]
    %v1671 = vld [vmem:[%s12 + $0x28] sm:$0xff]
    %v1672 = vld [vmem:[%s12 + $0x30] sm:$0xff]
    %v1673 = vld [vmem:[%s12 + $0x38] sm:$0xff]
    %v1674 = vld [vmem:[%s12 + $0x40] sm:$0x1]
    %v1676 = vsel %vm355, %v1665, 0
    %1678 = vmatprep.subr.mxu0 0.0
    %1679 = vmatpush1.msra.mxu0 %v1666
    %1680 = vmatprep.subr.mxu0 0.0
    %1681 = vmatpush1.msra.mxu0 %v1667
    %1682 = vmatprep.subr.mxu0 0.0
    %1683 = vmatpush1.msra.mxu0 %v1668
    %1684 = vmatprep.subr.mxu0 0.0
    %1685 = vmatpush1.msra.mxu0 %v1669
    %1686 = vmatprep.subr.mxu0 0.0
    %1687 = vmatpush1.msra.mxu0 %v1670
    %1688 = vmatprep.subr.mxu0 0.0
    %1689 = vmatpush1.msra.mxu0 %v1671
    %1690 = vmatprep.subr.mxu0 0.0
    %1691 = vmatpush1.msra.mxu0 %v1672
    %1692 = vmatprep.subr.mxu0 0.0
    %1693 = vmatpush1.msra.mxu0 %v1673
    %1694 = vmatprep.subr.mxu0 0.0
    %1695 = vmatpush1.msra.mxu0 0.0
    %1696 = vmatprep.subr.mxu0 0.0
    %1697 = vmatpush1.msra.mxu0 0.0
    %1698 = vmatprep.subr.mxu0 0.0
    %1699 = vmatpush1.msra.mxu0 0.0
    %1700 = vmatprep.subr.mxu0 0.0
    %1701 = vmatpush1.msra.mxu0 0.0
    %1702 = vmatprep.subr.mxu0 0.0
    %1703 = vmatpush1.msra.mxu0 0.0
    %1704 = vmatprep.subr.mxu0 0.0
    %1705 = vmatpush1.msra.mxu0 0.0
    %1706 = vmatprep.subr.mxu0 0.0
    %1707 = vmatpush1.msra.mxu0 0.0
    %1708 = vmatprep.subr.mxu0 0.0
    %1709 = vmatpush1.msra.mxu0 0.0
    %1710 = vmatprep.subr.mxu0 0.0
    %1711 = vmatpush1.msra.mxu0 0.0
    %1712 = vmatprep.subr.mxu0 0.0
    %1713 = vmatpush1.msra.mxu0 0.0
    %1714 = vmatprep.subr.mxu0 0.0
    %1715 = vmatpush1.msra.mxu0 0.0
    %1716 = vmatprep.subr.mxu0 0.0
    %1717 = vmatpush1.msra.mxu0 0.0
    %1718 = vmatprep.subr.mxu0 0.0
    %1719 = vmatpush1.msra.mxu0 0.0
    %1720 = vmatprep.subr.mxu0 0.0
    %1721 = vmatpush1.msra.mxu0 0.0
    %1722 = vmatprep.subr.mxu0 0.0
    %1723 = vmatpush1.msra.mxu0 0.0
    %1724 = vmatprep.subr.mxu0 0.0
    %1725 = vmatpush1.msra.mxu0 0.0
    %1726 = vmatprep.subr.mxu0 0.0
    %1727 = vmatpush1.msra.mxu0 0.0
    %1728 = vmatprep.subr.mxu0 0.0
    %1729 = vmatpush1.msra.mxu0 0.0
    %1730 = vmatprep.subr.mxu0 0.0
    %1731 = vmatpush1.msra.mxu0 0.0
    %1732 = vmatprep.subr.mxu0 0.0
    %1733 = vmatpush1.msra.mxu0 0.0
    %1734 = vmatprep.subr.mxu0 0.0
    %1735 = vmatpush1.msra.mxu0 0.0
    %1736 = vmatprep.subr.mxu0 0.0
    %1737 = vmatpush1.msra.mxu0 0.0
    %1738 = vmatprep.subr.mxu0 0.0
    %1739 = vmatpush1.msra.mxu0 0.0
    %1740 = vmatprep.subr.mxu0 0.0
    %1741 = vmatpush1.msra.mxu0 0.0
    %1742 = vmatprep.mubr.f32.mxu0 0.0
    %1743 = vmatmul.mubr.f32.gmra.mrb[0].mxu0 %v1676
    %v1744 = vpop.f32.mrb[0].mxu0
    %v1745 = vadd.f32 %v1674, %v1744
    %v1746 = vpop.f32.mrb[0].mxu0
    %1747 = vdwg.mxu0
    %v1748 = vmax.f32 %v1745, 0.0
    %v1749 = vld [vmem:[%s13] sm:$0xff]
    %v1750 = vld [vmem:[%s13 + $0x8] sm:$0xff]
    %v1751 = vld [vmem:[%s13 + $0x10] sm:$0x1]
    %vm1752 = vcmask 130048
    %v1754 = vsel %vm1752, %v1748, 0
    %1756 = vmatprep.subr.mxu0 0.0
    %1757 = vmatpush1.msra.mxu0 %v1749
    %1758 = vmatprep.subr.mxu0 0.0
    %1759 = vmatpush1.msra.mxu0 %v1750
    %1760 = vmatprep.subr.mxu0 0.0
    %1761 = vmatpush1.msra.mxu0 0.0
    %1762 = vmatprep.subr.mxu0 0.0
    %1763 = vmatpush1.msra.mxu0 0.0
    %1764 = vmatprep.subr.mxu0 0.0
    %1765 = vmatpush1.msra.mxu0 0.0
    %1766 = vmatprep.subr.mxu0 0.0
    %1767 = vmatpush1.msra.mxu0 0.0
    %1768 = vmatprep.subr.mxu0 0.0
    %1769 = vmatpush1.msra.mxu0 0.0
    %1770 = vmatprep.subr.mxu0 0.0
    %1771 = vmatpush1.msra.mxu0 0.0
    %1772 = vmatprep.subr.mxu0 0.0
    %1773 = vmatpush1.msra.mxu0 0.0
    %1774 = vmatprep.subr.mxu0 0.0
    %1775 = vmatpush1.msra.mxu0 0.0
    %1776 = vmatprep.subr.mxu0 0.0
    %1777 = vmatpush1.msra.mxu0 0.0
    %1778 = vmatprep.subr.mxu0 0.0
    %1779 = vmatpush1.msra.mxu0 0.0
    %1780 = vmatprep.subr.mxu0 0.0
    %1781 = vmatpush1.msra.mxu0 0.0
    %1782 = vmatprep.subr.mxu0 0.0
    %1783 = vmatpush1.msra.mxu0 0.0
    %1784 = vmatprep.subr.mxu0 0.0
    %1785 = vmatpush1.msra.mxu0 0.0
    %1786 = vmatprep.subr.mxu0 0.0
    %1787 = vmatpush1.msra.mxu0 0.0
    %1788 = vmatprep.subr.mxu0 0.0
    %1789 = vmatpush1.msra.mxu0 0.0
    %1790 = vmatprep.subr.mxu0 0.0
    %1791 = vmatpush1.msra.mxu0 0.0
    %1792 = vmatprep.subr.mxu0 0.0
    %1793 = vmatpush1.msra.mxu0 0.0
    %1794 = vmatprep.subr.mxu0 0.0
    %1795 = vmatpush1.msra.mxu0 0.0
    %1796 = vmatprep.subr.mxu0 0.0
    %1797 = vmatpush1.msra.mxu0 0.0
    %1798 = vmatprep.subr.mxu0 0.0
    %1799 = vmatpush1.msra.mxu0 0.0
    %1800 = vmatprep.subr.mxu0 0.0
    %1801 = vmatpush1.msra.mxu0 0.0
    %1802 = vmatprep.subr.mxu0 0.0
    %1803 = vmatpush1.msra.mxu0 0.0
    %1804 = vmatprep.subr.mxu0 0.0
    %1805 = vmatpush1.msra.mxu0 0.0
    %1806 = vmatprep.subr.mxu0 0.0
    %1807 = vmatpush1.msra.mxu0 0.0
    %1808 = vmatprep.subr.mxu0 0.0
    %1809 = vmatpush1.msra.mxu0 0.0
    %1810 = vmatprep.subr.mxu0 0.0
    %1811 = vmatpush1.msra.mxu0 0.0
    %1812 = vmatprep.subr.mxu0 0.0
    %1813 = vmatpush1.msra.mxu0 0.0
    %1814 = vmatprep.subr.mxu0 0.0
    %1815 = vmatpush1.msra.mxu0 0.0
    %1816 = vmatprep.subr.mxu0 0.0
    %1817 = vmatpush1.msra.mxu0 0.0
    %1818 = vmatprep.subr.mxu0 0.0
    %1819 = vmatpush1.msra.mxu0 0.0
    %1820 = vmatprep.mubr.f32.mxu0 0.0
    %1821 = vmatmul.mubr.f32.gmra.mrb[0].mxu0 %v1754
    %v1822 = vpop.f32.mrb[0].mxu0
    %v1823 = vadd.f32 %v1751, %v1822
    %v1824 = vpop.f32.mrb[0].mxu0
    %1825 = vdwg.mxu0
    %vm1826 = vcmask 24576
    %1827 = vst.msk [vmem:[#allocation2] sm:$0x1] %vm1826, %v1823
    // Predicated region
    $region58: #{forward.1} parent=1 // pred_check
      _
    $region59: #{forward.1} parent=1 // pred_check_branch
      %1829 = sbr.rel (0) target = $region61
    $region60: #{forward.1} parent=1 // pred_region
      %s1831 = ssub.s32 16, 16
      %1832 = vsyncadd [#allocation3], %s1831
      %s1834 = sshll.u32 [#allocation2], 4
      %s1835 = int_to_ptr.vmem [resolvable:$true] %s1834
      %1837 = dma.vmem_to_hbm [thread:$0]  %s1835, 16, %s14, [#allocation3]
    $region61: #{forward.1} parent=1 // pred_fallthru
      _
    // Predicated region
    $region62: #{forward.1} parent=1 // pred_check
      _
    $region63: #{forward.1} parent=1 // pred_check_branch
      %1839 = sbr.rel (0) target = $region65
    $region64: #{forward.1} parent=1 // pred_region
      %1840 = dma.done [#allocation3], 16
    $region65: #{forward.1} parent=1 // pred_fallthru
      _
    %1841 = vsyncpa [#allocation3], 1

</llo_original>
